<compile_context>
chip_gen: v6e
topology: v6e:2x2x1
jax: 0.10.0
libtpu: 0.0.40
codegen_flags: <defaults>
</compile_context>

<pallas_src>
import functools

import jax
import jax.numpy as jnp
from jax.experimental import pallas as pl
from jax.experimental.pallas import tpu as pltpu


def _bdot(a, b):
    """bf16 operands on the MXU, f32 accumulation (used by the pure-JAX reference)."""
    return jnp.dot(a.astype(jnp.bfloat16), b.astype(jnp.bfloat16),
                   preferred_element_type=jnp.float32)


def _cheb_operator(edge_index, edge_weight, n_node):
    """Dense T_1(L_hat) = -D^{-1/2} A D^{-1/2} used by ChebConv(K=2, sym, lambda_max=2).

    Mirrors PyG ChebConv.__norm__: self loops removed before computing degrees,
    deg^-1/2 with 1/sqrt(0) -> 0, diagonal of the scaled Laplacian zeroed.
    A[dst, src] = w(src -> dst); degrees taken over the source axis (symmetric edge
    weights are used in the test so in/out degree conventions coincide).
    """
    src, dst = edge_index[0], edge_index[1]
    a = jnp.zeros((n_node, n_node), jnp.float32).at[dst, src].add(edge_weight)
    a = a * (1.0 - jnp.eye(n_node, dtype=jnp.float32))     # remove self loops
    deg = a.sum(axis=0)
    dinv = jnp.where(deg > 0, 1.0 / jnp.sqrt(deg), 0.0)
    return -(dinv[:, None] * a * dinv[None, :])


def stconv_kernel(x_ref, abig_ref, wt1_ref, bt1_ref, wc_ref, bc_ref,
                  wt2_ref, bt2_ref, bn_ref, wl_ref, bl_ref, y_ref,
                  *, n_node, d_hide, kt, t1, bb):
    N, C, Kt, T1 = n_node, d_hide, kt, t1
    T2 = T1 - (Kt - 1)
    f32, bf16 = jnp.float32, jnp.bfloat16

    def glu(s):   # relu(p * sigmoid(q) + r) on the fused 3C-wide gate block
        return jax.nn.relu(s[:, :C] * jax.nn.sigmoid(s[:, C:2 * C]) + s[:, 2 * C:])

    x = x_ref[0]                                   # (bb*T1*N, Kt*F) bf16, im2col rows
                                                   # ordered (sample, time, node)

    # ---- TemporalConv1: ONE GEMM (K = Kt*F); taps + gates fused into the operands.
    s1 = jnp.dot(x, wt1_ref[...], preferred_element_type=f32) + bt1_ref[...]
    h1 = glu(s1).astype(bf16)                      # (bb*T1*N, C)

    # ---- ChebConv K=2 (sym, lambda_max=2): G = H@W0 + L_hat@(H@W1) + b.
    # [W0|W1] fused into a single 2C-wide matmul; graph propagation applied per sample
    # via the block-diagonal A_big = I_{T1} (x) L_hat (good MXU shape at this size).
    u = jnp.dot(h1, wc_ref[...], preferred_element_type=f32)       # (bb*T1*N, 2C)
    u1 = u[:, C:].astype(bf16)
    abig = abig_ref[...]
    lu = [jnp.dot(abig, u1[i * T1 * N:(i + 1) * T1 * N], preferred_element_type=f32)
          for i in range(bb)]
    lu = lu[0] if bb == 1 else jnp.concatenate(lu, axis=0)
    g = jax.nn.relu(u[:, :C] + lu + bc_ref[...]).astype(bf16)      # (bb*T1*N, C)

    # ---- TemporalConv2 (fused gates, per-tap / per-sample row windows).
    s2_parts = []
    for i in range(bb):
        base = i * T1 * N
        acc = None
        for k in range(Kt):
            gk = g[base + k * N: base + (k + T2) * N]              # (T2*N, C)
            term = jnp.dot(gk, wt2_ref[k], preferred_element_type=f32)
            acc = term if acc is None else acc + term
        s2_parts.append(acc)
    s2 = (s2_parts[0] if bb == 1 else jnp.concatenate(s2_parts, axis=0)) + bt2_ref[...]
    h2 = glu(s2)                                                   # (bb*T2*N, C) f32

    # ---- eval-mode BatchNorm2d(num_nodes) folded to per-row scale/shift + head ReLU.
    # bn_ref packs [scale | shift] lane-wise as (bb*T2*N, 2C).
    h3 = jax.nn.relu(h2 * bn_ref[:, :C] + bn_ref[:, C:])           # f32

    # ---- Linear head as ONE GEMM (K = T2*C): relayout time-major (T2*N, C) to
    # node-major (N, T2*C) per sample with a lane-dim concat (~20 KB f32, cheap),
    # cast once to bf16, then (bb*N, T2*C) @ (T2*C, d_pad).
    rows = []
    for i in range(bb):
        base = i * T2 * N
        rows.append(jnp.concatenate(
            [h3[base + t * N: base + (t + 1) * N] for t in range(T2)], axis=1))
    hcat = (rows[0] if bb == 1 else jnp.concatenate(rows, axis=0)).astype(bf16)
    y = jnp.dot(hcat, wl_ref[...], preferred_element_type=f32) + bl_ref[...]
    y_ref[0] = y.astype(y_ref.dtype)


@functools.partial(jax.jit, static_argnames=("kernel_size", "batch_block"))
def t_stconv_forward(x, edge_index, edge_weight, params, *, kernel_size,
                     batch_block=None):
    """x: (B, T, N, F); edge_index: (2, E) int32; edge_weight: (E,) f32."""
    B, T, N, F = x.shape
    Kt = kernel_size
    C = params["cheb_w0"].shape[0]
    T1 = T - (Kt - 1)
    T2 = T1 - (Kt - 1)
    d_d = params["lin_b"].shape[0]
    d_pad = pl.cdiv(d_d, 128) * 128                # lane-dense head output (7 -> 128)
    bf16 = jnp.bfloat16

    # Batch blocking: bb samples merged into the MXU M dimension per grid step.
    # Default keeps >= 2 parallel grid steps (v7x: one per TensorCore); pass
    # batch_block=B on single-TC v5e / v6e to fold the whole batch into one step.
    bb = batch_block if batch_block is not None else max(1, B // 2)
    assert B % bb == 0, "batch_block must divide the batch size"

    # --- XLA glue: dense Chebyshev operator and its block-diagonal lift I_{T1} (x) L_hat
    # (one MXU launch per sample applies the graph conv to every time step).
    # TODO(synk): at production N use L_hat @ (N, T1*C) instead (A_big is (T1*N)^2 and
    # wastes ~T1x MACs; first VMEM failure under v7x's 64 MiB) and single-buffer the
    # constant operands.
    l_hat = _cheb_operator(edge_index, edge_weight, N)
    a_big = jnp.kron(jnp.eye(T1, dtype=jnp.float32), l_hat)

    # --- im2col over the temporal taps: rows (sample, time, node), cols (tap, feature).
    x_taps = jnp.stack([x[:, k:k + T1] for k in range(Kt)], axis=3)   # (B, T1, N, Kt, F)
    x2 = x_taps.reshape(B // bb, bb * T1 * N, Kt * F).astype(bf16)

    # --- parameter packing: 3 TC weight sets fused to (Kt*F, 3C) / (Kt, C, 3C), the 2
    # Cheb weight sets to (C, 2C), BN folded + pre-broadcast + packed, head flat/padded.
    w_tc1 = jnp.concatenate([params["w1_p"], params["w1_q"], params["w1_r"]], axis=-1)
    w_tc1 = w_tc1.reshape(Kt * F, 3 * C)
    b_tc1 = jnp.concatenate([params["b1_p"], params["b1_q"], params["b1_r"]])[None, :]
    w_cheb = jnp.concatenate([params["cheb_w0"], params["cheb_w1"]], axis=-1)
    b_cheb = params["cheb_b"][None, :]
    w_tc2 = jnp.concatenate([params["w2_p"], params["w2_q"], params["w2_r"]], axis=-1)
    b_tc2 = jnp.concatenate([params["b2_p"], params["b2_q"], params["b2_r"]])[None, :]

    bn_scale = params["bn_gamma"] / jnp.sqrt(params["bn_var"] + 1e-5)        # (N,)
    bn_shift = params["bn_beta"] - params["bn_mean"] * bn_scale              # (N,)
    bn_pack = jnp.concatenate(
        [jnp.broadcast_to(jnp.tile(bn_scale, T2)[:, None], (T2 * N, C)),
         jnp.broadcast_to(jnp.tile(bn_shift, T2)[:, None], (T2 * N, C))], axis=1)
    bn_pack = jnp.tile(bn_pack, (bb, 1))                                     # (bb*T2*N, 2C)

    w_lin = jnp.pad(params["lin_w"], ((0, 0), (0, d_pad - d_d)))             # (T2*C, d_pad)
    b_lin = jnp.pad(params["lin_b"], (0, d_pad - d_d))[None, :]

    def bcast(shape):
        return pl.BlockSpec(shape, lambda b: (0,) * len(shape))

    kernel = functools.partial(stconv_kernel, n_node=N, d_hide=C, kt=Kt, t1=T1, bb=bb)

    y_pad = pl.pallas_call(
        kernel,
        out_shape=jax.ShapeDtypeStruct((B // bb, bb * N, d_pad), jnp.float32),
        grid=(B // bb,),
        in_specs=[
            pl.BlockSpec((1, bb * T1 * N, Kt * F), lambda b: (b, 0, 0)),  # x (im2col)
            bcast((T1 * N, T1 * N)),                            # A_big      (broadcast)
            bcast((Kt * F, 3 * C)), bcast((1, 3 * C)),          # TC1 fused weight, bias
            bcast((C, 2 * C)), bcast((1, C)),                   # Cheb weights, bias
            bcast((Kt, C, 3 * C)), bcast((1, 3 * C)),           # TC2 weights, fused bias
            bcast((bb * T2 * N, 2 * C)),                        # BN [scale | shift]
            bcast((T2 * C, d_pad)), bcast((1, d_pad)),          # head weight (flat), bias
        ],
        out_specs=pl.BlockSpec((1, bb * N, d_pad), lambda b: (b, 0, 0)),
        compiler_params=pltpu.CompilerParams(
            dimension_semantics=("parallel",)),
    )(x2, a_big.astype(bf16),
      w_tc1.astype(bf16), b_tc1,
      w_cheb.astype(bf16), b_cheb,
      w_tc2.astype(bf16), b_tc2,
      bn_pack,
      w_lin.astype(bf16), b_lin)

    return y_pad.reshape(B, N, d_pad)[:, :, :d_d]


def reference_forward(x, edge_index, edge_weight, params, *, kernel_size):
    """Pure-JAX reference mirroring torch STConv + Linear head (eval-mode BatchNorm),
    using the same bf16-matmul / f32-accumulate policy as the kernel."""
    B, T, N, F = x.shape
    Kt = kernel_size
    l_hat = _cheb_operator(edge_index, edge_weight, N)

    def temporal_conv(h, wp, bp, wq, bq, wr, br):
        t_out = h.shape[1] - (Kt - 1)

        def conv(w, b):
            return sum(_bdot(h[:, k:k + t_out], w[k]) for k in range(Kt)) + b

        return jax.nn.relu(conv(wp, bp) * jax.nn.sigmoid(conv(wq, bq)) + conv(wr, br))

    h = temporal_conv(x, params["w1_p"], params["b1_p"], params["w1_q"], params["b1_q"],
                      params["w1_r"], params["b1_r"])                       # (B, T1, N, C)

    # ChebConv(K=2): x @ W0 + (L_hat x) @ W1 + b, independently per (batch, time step).
    u1 = _bdot(h, params["cheb_w1"])
    lu1 = jnp.einsum("ij,btjc->btic", l_hat.astype(jnp.bfloat16),
                     u1.astype(jnp.bfloat16), preferred_element_type=jnp.float32)
    h = jax.nn.relu(_bdot(h, params["cheb_w0"]) + lu1 + params["cheb_b"])

    h = temporal_conv(h, params["w2_p"], params["b2_p"], params["w2_q"], params["b2_q"],
                      params["w2_r"], params["b2_r"])                       # (B, T2, N, C)

    # BatchNorm2d(num_nodes) in eval mode (node axis is the BN channel axis).
    mean = params["bn_mean"][None, None, :, None]
    var = params["bn_var"][None, None, :, None]
    gamma = params["bn_gamma"][None, None, :, None]
    beta = params["bn_beta"][None, None, :, None]
    h = gamma * (h - mean) / jnp.sqrt(var + 1e-5) + beta

    # T_STConv head: relu -> (B, N, T2*C) -> Linear.
    h = jax.nn.relu(h)
    h = jnp.transpose(h, (0, 2, 1, 3)).reshape(B, N, -1)
    return _bdot(h, params["lin_w"]) + params["lin_b"]


def init_params(key, n_node, n_feature, d_hide, d_d, kernel_size, t_in):
    T2 = t_in - 2 * (kernel_size - 1)
    C, F, Kt = d_hide, n_feature, kernel_size
    ks = jax.random.split(key, 21)

    def u(k, shape, scale):
        return (jax.random.uniform(k, shape, jnp.float32) * 2.0 - 1.0) * scale

    return {
        # TemporalConv1: per-tap (Kt, F, C) weights for conv_1 (p), conv_2 (q), conv_3 (r)
        "w1_p": u(ks[0], (Kt, F, C), 0.4), "b1_p": u(ks[1], (C,), 0.1),
        "w1_q": u(ks[2], (Kt, F, C), 0.4), "b1_q": u(ks[3], (C,), 0.1),
        "w1_r": u(ks[4], (Kt, F, C), 0.4), "b1_r": u(ks[5], (C,), 0.1),
        # ChebConv K=2 (weights pre-transposed to (in, out))
        "cheb_w0": u(ks[6], (C, C), 0.25), "cheb_w1": u(ks[7], (C, C), 0.25),
        "cheb_b": u(ks[8], (C,), 0.1),
        # TemporalConv2
        "w2_p": u(ks[9], (Kt, C, C), 0.15), "b2_p": u(ks[10], (C,), 0.1),
        "w2_q": u(ks[11], (Kt, C, C), 0.15), "b2_q": u(ks[12], (C,), 0.1),
        "w2_r": u(ks[13], (Kt, C, C), 0.15), "b2_r": u(ks[14], (C,), 0.1),
        # BatchNorm2d(num_nodes), eval mode
        "bn_gamma": 1.0 + u(ks[15], (n_node,), 0.2),
        "bn_beta": u(ks[16], (n_node,), 0.1),
        "bn_mean": u(ks[17], (n_node,), 0.1),
        "bn_var": 1.0 + u(ks[18], (n_node,), 0.3),
        # head Linear(T2*C -> d_d), pre-transposed, flat index = t*C + c
        "lin_w": u(ks[19], (T2 * C, d_d), 0.1),
        "lin_b": u(ks[20], (d_d,), 0.1),
    }


if __name__ == "__main__":
    key = jax.random.PRNGKey(0)
    B, N, F, C, d_d, Kt, d_e = 2, 16, 4, 32, 7, 3, 14   # d_e=14 input steps, d_d=7 outputs

    k_x, k_w, k_p = jax.random.split(key, 3)
    x = jax.random.normal(k_x, (B, d_e, N, F), jnp.float32)

    # deterministic ring graph with symmetric edge weights (both directions)
    src = jnp.arange(N, dtype=jnp.int32)
    dst = (src + 1) % N
    w_und = jax.random.uniform(k_w, (N,), jnp.float32) + 0.5
    edge_index = jnp.concatenate(
        [jnp.stack([src, dst]), jnp.stack([dst, src])], axis=1)        # (2, 2N)
    edge_weight = jnp.concatenate([w_und, w_und])

    params = init_params(k_p, N, F, C, d_d, Kt, d_e)

    y_ref = reference_forward(x, edge_index, edge_weight, params, kernel_size=Kt)

    # Default batch blocking: 2 "parallel" grid steps (one per v7x TensorCore).
    y = t_stconv_forward(x, edge_index, edge_weight, params, kernel_size=Kt)
    jax.block_until_ready(y)
    assert y.shape == (B, N, d_d)
    max_err = float(jnp.max(jnp.abs(y - y_ref)))
    assert jnp.allclose(y, y_ref, atol=1e-2, rtol=1e-2), f"max abs err {max_err}"

    # Whole batch folded into one grid step (the single-TC v5e / v6e configuration).
    y2 = t_stconv_forward(x, edge_index, edge_weight, params, kernel_size=Kt,
                          batch_block=B)
    jax.block_until_ready(y2)
    max_err2 = float(jnp.max(jnp.abs(y2 - y_ref)))
    assert jnp.allclose(y2, y_ref, atol=1e-2, rtol=1e-2), f"max abs err {max_err2}"

    print("KERNEL_OK")
</pallas_src>

<mosaic_0001>
module attributes {stable_mosaic.version = 11 : i64} {
  func.func private @main(%arg0: i32) attributes {dimension_semantics = [#tpu.dimension_semantics<core_parallel>], iteration_bounds = array<i64: 2>, tpu.core_type = #tpu.core_type<sc_scalar_subcore>, window_params = []} {
    return
  }
}

module attributes {stable_mosaic.version = 11 : i64} {
  func.func private @main(%arg0: i32) attributes {dimension_semantics = [#tpu.dimension_semantics<core_parallel>], iteration_bounds = array<i64: 2>, tpu.core_type = #tpu.core_type<sc_scalar_subcore>, window_params = []} {
    return
  }
}

module attributes {stable_mosaic.version = 11 : i64} {
  func.func @stconv_kernel(%arg0: i32, %arg1: memref<1x192x12xbf16, #tpu.memory_space<vmem>>, %arg2: memref<192x192xbf16, #tpu.memory_space<vmem>>, %arg3: memref<12x96xbf16, #tpu.memory_space<vmem>>, %arg4: memref<1x96xf32, #tpu.memory_space<vmem>>, %arg5: memref<32x64xbf16, #tpu.memory_space<vmem>>, %arg6: memref<1x32xf32, #tpu.memory_space<vmem>>, %arg7: memref<3x32x96xbf16, #tpu.memory_space<vmem>>, %arg8: memref<1x96xf32, #tpu.memory_space<vmem>>, %arg9: memref<160x64xf32, #tpu.memory_space<vmem>>, %arg10: memref<320x128xbf16, #tpu.memory_space<vmem>>, %arg11: memref<1x128xf32, #tpu.memory_space<vmem>>, %arg12: memref<1x16x128xf32, #tpu.memory_space<vmem>>) attributes {dimension_semantics = [#tpu.dimension_semantics<parallel>], iteration_bounds = array<i64: 2>, scalar_prefetch = 0 : i64, scratch_operands = 0 : i64, tpu.core_type = #tpu.core_type<tc>, window_params = [{transform_indices = @transform_0, window_bounds = array<i64: 1, 192, 12>}, {pipeline_mode = #tpu.pipeline_mode<synchronous>, transform_indices = @transform_1, window_bounds = array<i64: 192, 192>}, {pipeline_mode = #tpu.pipeline_mode<synchronous>, transform_indices = @transform_2, window_bounds = array<i64: 12, 96>}, {pipeline_mode = #tpu.pipeline_mode<synchronous>, transform_indices = @transform_3, window_bounds = array<i64: 1, 96>}, {pipeline_mode = #tpu.pipeline_mode<synchronous>, transform_indices = @transform_4, window_bounds = array<i64: 32, 64>}, {pipeline_mode = #tpu.pipeline_mode<synchronous>, transform_indices = @transform_5, window_bounds = array<i64: 1, 32>}, {pipeline_mode = #tpu.pipeline_mode<synchronous>, transform_indices = @transform_6, window_bounds = array<i64: 3, 32, 96>}, {pipeline_mode = #tpu.pipeline_mode<synchronous>, transform_indices = @transform_7, window_bounds = array<i64: 1, 96>}, {pipeline_mode = #tpu.pipeline_mode<synchronous>, transform_indices = @transform_8, window_bounds = array<i64: 160, 64>}, {pipeline_mode = #tpu.pipeline_mode<synchronous>, transform_indices = @transform_9, window_bounds = array<i64: 320, 128>}, {pipeline_mode = #tpu.pipeline_mode<synchronous>, transform_indices = @transform_10, window_bounds = array<i64: 1, 128>}, {transform_indices = @transform_11, window_bounds = array<i64: 1, 16, 128>}]} {
    %c0 = arith.constant 0 : index
    %c0_0 = arith.constant 0 : index
    %c0_1 = arith.constant 0 : index
    %0 = vector.load %arg1[%c0, %c0_0, %c0_1] : memref<1x192x12xbf16, #tpu.memory_space<vmem>>, vector<1x192x12xbf16>
    %1 = vector.shape_cast %0 : vector<1x192x12xbf16> to vector<192x12xbf16>
    %c0_2 = arith.constant 0 : index
    %c0_3 = arith.constant 0 : index
    %2 = vector.load %arg3[%c0_2, %c0_3] : memref<12x96xbf16, #tpu.memory_space<vmem>>, vector<12x96xbf16>
    %cst = arith.constant dense<0.000000e+00> : vector<192x96xf32>
    %3 = tpu.matmul %1, %2, %cst {dimension_numbers = #tpu.dot_dimension_numbers<[1], [0], [0], [1], [0, 0, 1, 1], [], []>} : vector<192x12xbf16>, vector<12x96xbf16>, vector<192x96xf32> -> vector<192x96xf32>
    %c0_4 = arith.constant 0 : index
    %c0_5 = arith.constant 0 : index
    %4 = vector.load %arg4[%c0_4, %c0_5] : memref<1x96xf32, #tpu.memory_space<vmem>>, vector<1x96xf32>
    %5 = vector.broadcast %4 : vector<1x96xf32> to vector<192x96xf32>
    %6 = arith.addf %3, %5 : vector<192x96xf32>
    %7 = vector.extract_strided_slice %6 {offsets = [0, 0], sizes = [192, 32], strides = [1, 1]} : vector<192x96xf32> to vector<192x32xf32>
    %8 = vector.extract_strided_slice %6 {offsets = [0, 32], sizes = [192, 32], strides = [1, 1]} : vector<192x96xf32> to vector<192x32xf32>
    %9 = arith.negf %8 : vector<192x32xf32>
    %10 = math.exp %9 : vector<192x32xf32>
    %cst_6 = arith.constant 1.000000e+00 : f32
    %11 = vector.broadcast %cst_6 : f32 to vector<192x32xf32>
    %12 = arith.addf %11, %10 : vector<192x32xf32>
    %13 = arith.divf %11, %12 : vector<192x32xf32>
    %14 = arith.mulf %7, %13 : vector<192x32xf32>
    %15 = vector.extract_strided_slice %6 {offsets = [0, 64], sizes = [192, 32], strides = [1, 1]} : vector<192x96xf32> to vector<192x32xf32>
    %16 = arith.addf %14, %15 : vector<192x32xf32>
    %cst_7 = arith.constant 0.000000e+00 : f32
    %17 = vector.broadcast %cst_7 : f32 to vector<192x32xf32>
    %18 = arith.maximumf %16, %17 : vector<192x32xf32>
    %19 = arith.truncf %18 : vector<192x32xf32> to vector<192x32xbf16>
    %c0_8 = arith.constant 0 : index
    %c0_9 = arith.constant 0 : index
    %20 = vector.load %arg5[%c0_8, %c0_9] : memref<32x64xbf16, #tpu.memory_space<vmem>>, vector<32x64xbf16>
    %cst_10 = arith.constant dense<0.000000e+00> : vector<192x64xf32>
    %21 = tpu.matmul %19, %20, %cst_10 {dimension_numbers = #tpu.dot_dimension_numbers<[1], [0], [0], [1], [0, 0, 1, 1], [], []>} : vector<192x32xbf16>, vector<32x64xbf16>, vector<192x64xf32> -> vector<192x64xf32>
    %22 = vector.extract_strided_slice %21 {offsets = [0, 32], sizes = [192, 32], strides = [1, 1]} : vector<192x64xf32> to vector<192x32xf32>
    %23 = arith.truncf %22 : vector<192x32xf32> to vector<192x32xbf16>
    %c0_11 = arith.constant 0 : index
    %c0_12 = arith.constant 0 : index
    %24 = vector.load %arg2[%c0_11, %c0_12] : memref<192x192xbf16, #tpu.memory_space<vmem>>, vector<192x192xbf16>
    %cst_13 = arith.constant dense<0.000000e+00> : vector<192x32xf32>
    %25 = tpu.matmul %24, %23, %cst_13 {dimension_numbers = #tpu.dot_dimension_numbers<[1], [0], [0], [1], [0, 0, 1, 1], [], []>} : vector<192x192xbf16>, vector<192x32xbf16>, vector<192x32xf32> -> vector<192x32xf32>
    %26 = vector.extract_strided_slice %21 {offsets = [0, 0], sizes = [192, 32], strides = [1, 1]} : vector<192x64xf32> to vector<192x32xf32>
    %27 = arith.addf %26, %25 : vector<192x32xf32>
    %c0_14 = arith.constant 0 : index
    %c0_15 = arith.constant 0 : index
    %28 = vector.load %arg6[%c0_14, %c0_15] : memref<1x32xf32, #tpu.memory_space<vmem>>, vector<1x32xf32>
    %29 = vector.broadcast %28 : vector<1x32xf32> to vector<192x32xf32>
    %30 = arith.addf %27, %29 : vector<192x32xf32>
    %cst_16 = arith.constant 0.000000e+00 : f32
    %31 = vector.broadcast %cst_16 : f32 to vector<192x32xf32>
    %32 = arith.maximumf %30, %31 : vector<192x32xf32>
    %33 = arith.truncf %32 : vector<192x32xf32> to vector<192x32xbf16>
    %34 = vector.extract_strided_slice %33 {offsets = [0, 0], sizes = [160, 32], strides = [1, 1]} : vector<192x32xbf16> to vector<160x32xbf16>
    %c0_17 = arith.constant 0 : index
    %c0_18 = arith.constant 0 : index
    %c0_19 = arith.constant 0 : index
    %35 = vector.load %arg7[%c0_17, %c0_18, %c0_19] : memref<3x32x96xbf16, #tpu.memory_space<vmem>>, vector<1x32x96xbf16>
    %36 = vector.shape_cast %35 : vector<1x32x96xbf16> to vector<32x96xbf16>
    %cst_20 = arith.constant dense<0.000000e+00> : vector<160x96xf32>
    %37 = tpu.matmul %34, %36, %cst_20 {dimension_numbers = #tpu.dot_dimension_numbers<[1], [0], [0], [1], [0, 0, 1, 1], [], []>} : vector<160x32xbf16>, vector<32x96xbf16>, vector<160x96xf32> -> vector<160x96xf32>
    %38 = vector.extract_strided_slice %33 {offsets = [16, 0], sizes = [160, 32], strides = [1, 1]} : vector<192x32xbf16> to vector<160x32xbf16>
    %c1 = arith.constant 1 : index
    %c0_21 = arith.constant 0 : index
    %c0_22 = arith.constant 0 : index
    %39 = vector.load %arg7[%c1, %c0_21, %c0_22] : memref<3x32x96xbf16, #tpu.memory_space<vmem>>, vector<1x32x96xbf16>
    %40 = vector.shape_cast %39 : vector<1x32x96xbf16> to vector<32x96xbf16>
    %cst_23 = arith.constant dense<0.000000e+00> : vector<160x96xf32>
    %41 = tpu.matmul %38, %40, %cst_23 {dimension_numbers = #tpu.dot_dimension_numbers<[1], [0], [0], [1], [0, 0, 1, 1], [], []>} : vector<160x32xbf16>, vector<32x96xbf16>, vector<160x96xf32> -> vector<160x96xf32>
    %42 = arith.addf %37, %41 : vector<160x96xf32>
    %43 = vector.extract_strided_slice %33 {offsets = [32, 0], sizes = [160, 32], strides = [1, 1]} : vector<192x32xbf16> to vector<160x32xbf16>
    %c2 = arith.constant 2 : index
    %c0_24 = arith.constant 0 : index
    %c0_25 = arith.constant 0 : index
    %44 = vector.load %arg7[%c2, %c0_24, %c0_25] : memref<3x32x96xbf16, #tpu.memory_space<vmem>>, vector<1x32x96xbf16>
    %45 = vector.shape_cast %44 : vector<1x32x96xbf16> to vector<32x96xbf16>
    %cst_26 = arith.constant dense<0.000000e+00> : vector<160x96xf32>
    %46 = tpu.matmul %43, %45, %cst_26 {dimension_numbers = #tpu.dot_dimension_numbers<[1], [0], [0], [1], [0, 0, 1, 1], [], []>} : vector<160x32xbf16>, vector<32x96xbf16>, vector<160x96xf32> -> vector<160x96xf32>
    %47 = arith.addf %42, %46 : vector<160x96xf32>
    %c0_27 = arith.constant 0 : index
    %c0_28 = arith.constant 0 : index
    %48 = vector.load %arg8[%c0_27, %c0_28] : memref<1x96xf32, #tpu.memory_space<vmem>>, vector<1x96xf32>
    %49 = vector.broadcast %48 : vector<1x96xf32> to vector<160x96xf32>
    %50 = arith.addf %47, %49 : vector<160x96xf32>
    %51 = vector.extract_strided_slice %50 {offsets = [0, 0], sizes = [160, 32], strides = [1, 1]} : vector<160x96xf32> to vector<160x32xf32>
    %52 = vector.extract_strided_slice %50 {offsets = [0, 32], sizes = [160, 32], strides = [1, 1]} : vector<160x96xf32> to vector<160x32xf32>
    %53 = arith.negf %52 : vector<160x32xf32>
    %54 = math.exp %53 : vector<160x32xf32>
    %cst_29 = arith.constant 1.000000e+00 : f32
    %55 = vector.broadcast %cst_29 : f32 to vector<160x32xf32>
    %56 = arith.addf %55, %54 : vector<160x32xf32>
    %57 = arith.divf %55, %56 : vector<160x32xf32>
    %58 = arith.mulf %51, %57 : vector<160x32xf32>
    %59 = vector.extract_strided_slice %50 {offsets = [0, 64], sizes = [160, 32], strides = [1, 1]} : vector<160x96xf32> to vector<160x32xf32>
    %60 = arith.addf %58, %59 : vector<160x32xf32>
    %cst_30 = arith.constant 0.000000e+00 : f32
    %61 = vector.broadcast %cst_30 : f32 to vector<160x32xf32>
    %62 = arith.maximumf %60, %61 : vector<160x32xf32>
    %c0_31 = arith.constant 0 : index
    %c0_32 = arith.constant 0 : index
    %63 = vector.load %arg9[%c0_31, %c0_32] : memref<160x64xf32, #tpu.memory_space<vmem>>, vector<160x32xf32>
    %64 = arith.mulf %62, %63 : vector<160x32xf32>
    %c0_33 = arith.constant 0 : index
    %c32 = arith.constant 32 : index
    %65 = vector.load %arg9[%c0_33, %c32] : memref<160x64xf32, #tpu.memory_space<vmem>>, vector<160x32xf32>
    %66 = arith.addf %64, %65 : vector<160x32xf32>
    %cst_34 = arith.constant 0.000000e+00 : f32
    %67 = vector.broadcast %cst_34 : f32 to vector<160x32xf32>
    %68 = arith.maximumf %66, %67 : vector<160x32xf32>
    %69 = vector.extract_strided_slice %68 {offsets = [0, 0], sizes = [16, 32], strides = [1, 1]} : vector<160x32xf32> to vector<16x32xf32>
    %70 = vector.extract_strided_slice %68 {offsets = [16, 0], sizes = [16, 32], strides = [1, 1]} : vector<160x32xf32> to vector<16x32xf32>
    %71 = vector.extract_strided_slice %68 {offsets = [32, 0], sizes = [16, 32], strides = [1, 1]} : vector<160x32xf32> to vector<16x32xf32>
    %72 = vector.extract_strided_slice %68 {offsets = [48, 0], sizes = [16, 32], strides = [1, 1]} : vector<160x32xf32> to vector<16x32xf32>
    %73 = vector.extract_strided_slice %68 {offsets = [64, 0], sizes = [16, 32], strides = [1, 1]} : vector<160x32xf32> to vector<16x32xf32>
    %74 = vector.extract_strided_slice %68 {offsets = [80, 0], sizes = [16, 32], strides = [1, 1]} : vector<160x32xf32> to vector<16x32xf32>
    %75 = vector.extract_strided_slice %68 {offsets = [96, 0], sizes = [16, 32], strides = [1, 1]} : vector<160x32xf32> to vector<16x32xf32>
    %76 = vector.extract_strided_slice %68 {offsets = [112, 0], sizes = [16, 32], strides = [1, 1]} : vector<160x32xf32> to vector<16x32xf32>
    %77 = vector.extract_strided_slice %68 {offsets = [128, 0], sizes = [16, 32], strides = [1, 1]} : vector<160x32xf32> to vector<16x32xf32>
    %78 = vector.extract_strided_slice %68 {offsets = [144, 0], sizes = [16, 32], strides = [1, 1]} : vector<160x32xf32> to vector<16x32xf32>
    %79 = tpu.concatenate %69, %70, %71, %72, %73, %74, %75, %76, %77, %78 in 1 : vector<16x32xf32>, vector<16x32xf32>, vector<16x32xf32>, vector<16x32xf32>, vector<16x32xf32>, vector<16x32xf32>, vector<16x32xf32>, vector<16x32xf32>, vector<16x32xf32>, vector<16x32xf32> -> vector<16x320xf32>
    %80 = arith.truncf %79 : vector<16x320xf32> to vector<16x320xbf16>
    %c0_35 = arith.constant 0 : index
    %c0_36 = arith.constant 0 : index
    %81 = vector.load %arg10[%c0_35, %c0_36] : memref<320x128xbf16, #tpu.memory_space<vmem>>, vector<320x128xbf16>
    %cst_37 = arith.constant dense<0.000000e+00> : vector<16x128xf32>
    %82 = tpu.matmul %80, %81, %cst_37 {dimension_numbers = #tpu.dot_dimension_numbers<[1], [0], [0], [1], [0, 0, 1, 1], [], []>} : vector<16x320xbf16>, vector<320x128xbf16>, vector<16x128xf32> -> vector<16x128xf32>
    %c0_38 = arith.constant 0 : index
    %c0_39 = arith.constant 0 : index
    %83 = vector.load %arg11[%c0_38, %c0_39] : memref<1x128xf32, #tpu.memory_space<vmem>>, vector<1x128xf32>
    %84 = vector.broadcast %83 : vector<1x128xf32> to vector<16x128xf32>
    %85 = arith.addf %82, %84 : vector<16x128xf32>
    %c0_40 = arith.constant 0 : index
    %c0_41 = arith.constant 0 : index
    %c0_42 = arith.constant 0 : index
    %86 = vector.load %arg12[%c0_40, %c0_41, %c0_42] : memref<1x16x128xf32, #tpu.memory_space<vmem>>, vector<1x16x128xf32>
    %87 = vector.shape_cast %86 : vector<1x16x128xf32> to vector<16x128xf32>
    %88 = vector.shape_cast %85 : vector<16x128xf32> to vector<1x16x128xf32>
    tpu.vector_store %arg12[%c0_40, %c0_41, %c0_42], %88 {strides = array<i32>} : memref<1x16x128xf32, #tpu.memory_space<vmem>>, vector<1x16x128xf32>,
    return
  }
  func.func @transform_0(%arg0: i32) -> (i32, i32, i32) {
    %c0_i32 = arith.constant 0 : i32
    %c0_i32_0 = arith.constant 0 : i32
    %c0_i32_1 = arith.constant 0 : i32
    return %arg0, %c0_i32, %c0_i32_0 : i32, i32, i32
  }
  func.func @transform_1(%arg0: i32) -> (i32, i32) {
    %c0_i32 = arith.constant 0 : i32
    %c0_i32_0 = arith.constant 0 : i32
    %c0_i32_1 = arith.constant 0 : i32
    return %c0_i32, %c0_i32_0 : i32, i32
  }
  func.func @transform_2(%arg0: i32) -> (i32, i32) {
    %c0_i32 = arith.constant 0 : i32
    %c0_i32_0 = arith.constant 0 : i32
    %c0_i32_1 = arith.constant 0 : i32
    return %c0_i32, %c0_i32_0 : i32, i32
  }
  func.func @transform_3(%arg0: i32) -> (i32, i32) {
    %c0_i32 = arith.constant 0 : i32
    %c0_i32_0 = arith.constant 0 : i32
    %c0_i32_1 = arith.constant 0 : i32
    return %c0_i32, %c0_i32_0 : i32, i32
  }
  func.func @transform_4(%arg0: i32) -> (i32, i32) {
    %c0_i32 = arith.constant 0 : i32
    %c0_i32_0 = arith.constant 0 : i32
    %c0_i32_1 = arith.constant 0 : i32
    return %c0_i32, %c0_i32_0 : i32, i32
  }
  func.func @transform_5(%arg0: i32) -> (i32, i32) {
    %c0_i32 = arith.constant 0 : i32
    %c0_i32_0 = arith.constant 0 : i32
    %c0_i32_1 = arith.constant 0 : i32
    return %c0_i32, %c0_i32_0 : i32, i32
  }
  func.func @transform_6(%arg0: i32) -> (i32, i32, i32) {
    %c0_i32 = arith.constant 0 : i32
    %c0_i32_0 = arith.constant 0 : i32
    %c0_i32_1 = arith.constant 0 : i32
    %c0_i32_2 = arith.constant 0 : i32
    return %c0_i32, %c0_i32_0, %c0_i32_1 : i32, i32, i32
  }
  func.func @transform_7(%arg0: i32) -> (i32, i32) {
    %c0_i32 = arith.constant 0 : i32
    %c0_i32_0 = arith.constant 0 : i32
    %c0_i32_1 = arith.constant 0 : i32
    return %c0_i32, %c0_i32_0 : i32, i32
  }
  func.func @transform_8(%arg0: i32) -> (i32, i32) {
    %c0_i32 = arith.constant 0 : i32
    %c0_i32_0 = arith.constant 0 : i32
    %c0_i32_1 = arith.constant 0 : i32
    return %c0_i32, %c0_i32_0 : i32, i32
  }
  func.func @transform_9(%arg0: i32) -> (i32, i32) {
    %c0_i32 = arith.constant 0 : i32
    %c0_i32_0 = arith.constant 0 : i32
    %c0_i32_1 = arith.constant 0 : i32
    return %c0_i32, %c0_i32_0 : i32, i32
  }
  func.func @transform_10(%arg0: i32) -> (i32, i32) {
    %c0_i32 = arith.constant 0 : i32
    %c0_i32_0 = arith.constant 0 : i32
    %c0_i32_1 = arith.constant 0 : i32
    return %c0_i32, %c0_i32_0 : i32, i32
  }
  func.func @transform_11(%arg0: i32) -> (i32, i32, i32) {
    %c0_i32 = arith.constant 0 : i32
    %c0_i32_0 = arith.constant 0 : i32
    %c0_i32_1 = arith.constant 0 : i32
    return %arg0, %c0_i32, %c0_i32_0 : i32, i32, i32
  }
}

</mosaic_0001>

<llo_original>
// kernel: tile.13
$region0: #{tile.13}
  #allocation0 [shape = 's32[1]{0}', space=sflag, size = 0x4, scoped, tag = 'scoped memory for tile.13']
  %s0 = inlined_call_operand.vmem [shape: f32[16], index: 0, kind: input, shape index: {}]
  %s1 = inlined_call_operand.vmem [shape: f32[10,16], index: 1, kind: output, shape index: {}]
  // Predicated region
  $region2: #{tile.13} parent=0 // pred_check
    _
  $region3: #{tile.13} parent=0 // pred_check_branch
    %3 = sbr.rel (0) target = $region5
  $region4: #{tile.13} parent=0 // pred_region
    _
  $region5: #{tile.13} parent=0 // pred_fallthru
    _
  %v4 = vld [vmem:[%s0] ss:$0 sm:$0xff]
  %5 = vst [vmem:[%s1] sm:$0xff] %v4
  %s6 = scalar_lea.vmem %s1, 8
  %7 = vst [vmem:[%s6] sm:$0xff] %v4

// kernel: t_stconv_forward.1
$region0: #{t_stconv_forward.1}
  #allocation0 [shape = 'u32[]', space=smem, size = 0x4, offset = 0x4, fixed_abs, tag = 'smem constant byte address 0x4 - core index']
  #allocation1 [shape = 'u32[144,128]{1,0:T(1,128)}', space=vmem, size = 0x12000, scoped, tag = 'internal scratch']
  %s0 = inlined_call_operand.vmem [shape: bf16[2,192,12], index: 0, kind: input, shape index: {}]
  %s1 = inlined_call_operand.vmem [shape: bf16[192,192], index: 1, kind: input, shape index: {}]
  %s2 = inlined_call_operand.vmem [shape: bf16[12,96], index: 2, kind: input, shape index: {}]
  %s3 = inlined_call_operand.vmem [shape: f32[1,96], index: 3, kind: input, shape index: {}]
  %s4 = inlined_call_operand.vmem [shape: bf16[32,64], index: 4, kind: input, shape index: {}]
  %s5 = inlined_call_operand.vmem [shape: f32[1,32], index: 5, kind: input, shape index: {}]
  %s6 = inlined_call_operand.vmem [shape: bf16[3,32,96], index: 6, kind: input, shape index: {}]
  %s7 = inlined_call_operand.vmem [shape: f32[1,96], index: 7, kind: input, shape index: {}]
  %s8 = inlined_call_operand.vmem [shape: f32[160,64], index: 8, kind: input, shape index: {}]
  %s9 = inlined_call_operand.vmem [shape: bf16[320,128], index: 9, kind: input, shape index: {}]
  %s10 = inlined_call_operand.vmem [shape: f32[1,128], index: 10, kind: input, shape index: {}]
  %s11 = inlined_call_operand.vmem [shape: f32[2,16,128], index: 11, kind: output, shape index: {}]
  %s12 = sld [smem:[#allocation0]]
  $region77: #{t_stconv_forward.1} parent=0
    _
  %s14 = ssub.s32 1, %s12
  %s15 = scalar_select 0, %s14, %s12
  loop: start=0, step=1, limit=4
  $region2: #{t_stconv_forward.1} parent=0 // loop_pre_header
    _
  $region3: #{t_stconv_forward.1} parent=0 // loop_header
    %s17 = sphi 0, %s21
    %p18 = scmp.ge.s32.totalorder %s17, 4
    %s27 = sphi 0, %s29
    %s30 = sphi 0, %s27
    %s31 = sphi 0, %s30
    %s47 = sphi 0, %s31
    %s51 = sphi 0, %s51
    %s53 = sphi 0, %s51
    %s54 = sphi 0, %s53
    %s68 = sphi 0, %s54
    %s72 = sphi 0, %s72
    %s74 = sphi 0, %s72
    %s75 = sphi 0, %s74
    %s89 = sphi 0, %s75
    %s93 = sphi 0, %s93
    %s95 = sphi 0, %s93
    %s96 = sphi 0, %s95
    %s110 = sphi 0, %s96
    %s114 = sphi 0, %s114
    %s116 = sphi 0, %s114
    %s117 = sphi 0, %s116
    %s131 = sphi 0, %s117
    %s135 = sphi 0, %s135
    %s137 = sphi 0, %s135
    %s138 = sphi 0, %s137
    %s152 = sphi 0, %s138
    %s156 = sphi 0, %s156
    %s158 = sphi 0, %s156
    %s159 = sphi 0, %s158
    %s173 = sphi 0, %s159
    %s177 = sphi 0, %s177
    %s179 = sphi 0, %s177
    %s180 = sphi 0, %s179
    %s194 = sphi 0, %s180
    %s198 = sphi 0, %s198
    %s200 = sphi 0, %s198
    %s201 = sphi 0, %s200
    %s215 = sphi 0, %s201
    %s219 = sphi 0, %s219
    %s221 = sphi 0, %s219
    %s222 = sphi 0, %s221
    %s236 = sphi 0, %s222
    %s240 = sphi 0, %s240
    %s242 = sphi 0, %s240
    %s243 = sphi 0, %s242
    %s257 = sphi 0, %s243
    %s263 = sphi 0, %s265
    %s266 = sphi 0, %s263
    %s267 = sphi 0, %s266
    %s283 = sphi 0, %s267
  $region4: #{t_stconv_forward.1} parent=0 // loop_header_branch
    %20 = sbr.rel (%p18) target = $region8
  $region5: #{t_stconv_forward.1} parent=0 // loop_body
    %s22 = ssub.s32 %s17, 1
    %s23 = ssub.s32 %s17, 2
    %s24 = sadd.s32 %s17, 1
    %s25 = ssub.s32 %s17, %s24
    %p26 = scmp.eq.s32.totalorder %s25, 0
    %s28 = sadd.s32 %s27, 1
    %s29 = scalar_select %p26, %s27, %s28
    %p32 = pneg %p26
    %p33 = scmp.eq.s32.totalorder %s17, 1
    %p34 = por %p32, %p33
    %p35 = scmp.ne.s32.totalorder %s27, %s30
    %p36 = scmp.eq.s32.totalorder %s17, 0
    %p37 = por %p35, %p36
    %p38 = scmp.ne.s32.totalorder %s27, %s30
    %p39 = scmp.eq.s32.totalorder %s22, 1
    %p40 = por %p38, %p39
    %p41 = scmp.ne.s32.totalorder %s30, %s31
    %p42 = scmp.eq.s32.totalorder %s22, 0
    %p43 = por %p41, %p42
    %p44 = scmp.ne.s32.totalorder %s30, %s31
    %p45 = scmp.eq.s32.totalorder %s23, 1
    %p46 = por %p44, %p45
    %p48 = scmp.ne.s32.totalorder %s31, %s47
    %p49 = scmp.eq.s32.totalorder %s23, 0
    %p50 = por %p48, %p49
    %s52 = sadd.s32 %s51, 1
    %p55 = scmp.eq.s32.totalorder %s17, 1
    %p56 = scmp.ne.s32.totalorder %s51, %s53
    %p57 = scmp.eq.s32.totalorder %s17, 0
    %p58 = por %p56, %p57
    %p59 = scmp.ne.s32.totalorder %s51, %s53
    %p60 = scmp.eq.s32.totalorder %s22, 1
    %p61 = por %p59, %p60
    %p62 = scmp.ne.s32.totalorder %s53, %s54
    %p63 = scmp.eq.s32.totalorder %s22, 0
    %p64 = por %p62, %p63
    %p65 = scmp.ne.s32.totalorder %s53, %s54
    %p66 = scmp.eq.s32.totalorder %s23, 1
    %p67 = por %p65, %p66
    %p69 = scmp.ne.s32.totalorder %s54, %s68
    %p70 = scmp.eq.s32.totalorder %s23, 0
    %p71 = por %p69, %p70
    %s73 = sadd.s32 %s72, 1
    %p76 = scmp.eq.s32.totalorder %s17, 1
    %p77 = scmp.ne.s32.totalorder %s72, %s74
    %p78 = scmp.eq.s32.totalorder %s17, 0
    %p79 = por %p77, %p78
    %p80 = scmp.ne.s32.totalorder %s72, %s74
    %p81 = scmp.eq.s32.totalorder %s22, 1
    %p82 = por %p80, %p81
    %p83 = scmp.ne.s32.totalorder %s74, %s75
    %p84 = scmp.eq.s32.totalorder %s22, 0
    %p85 = por %p83, %p84
    %p86 = scmp.ne.s32.totalorder %s74, %s75
    %p87 = scmp.eq.s32.totalorder %s23, 1
    %p88 = por %p86, %p87
    %p90 = scmp.ne.s32.totalorder %s75, %s89
    %p91 = scmp.eq.s32.totalorder %s23, 0
    %p92 = por %p90, %p91
    %s94 = sadd.s32 %s93, 1
    %p97 = scmp.eq.s32.totalorder %s17, 1
    %p98 = scmp.ne.s32.totalorder %s93, %s95
    %p99 = scmp.eq.s32.totalorder %s17, 0
    %p100 = por %p98, %p99
    %p101 = scmp.ne.s32.totalorder %s93, %s95
    %p102 = scmp.eq.s32.totalorder %s22, 1
    %p103 = por %p101, %p102
    %p104 = scmp.ne.s32.totalorder %s95, %s96
    %p105 = scmp.eq.s32.totalorder %s22, 0
    %p106 = por %p104, %p105
    %p107 = scmp.ne.s32.totalorder %s95, %s96
    %p108 = scmp.eq.s32.totalorder %s23, 1
    %p109 = por %p107, %p108
    %p111 = scmp.ne.s32.totalorder %s96, %s110
    %p112 = scmp.eq.s32.totalorder %s23, 0
    %p113 = por %p111, %p112
    %s115 = sadd.s32 %s114, 1
    %p118 = scmp.eq.s32.totalorder %s17, 1
    %p119 = scmp.ne.s32.totalorder %s114, %s116
    %p120 = scmp.eq.s32.totalorder %s17, 0
    %p121 = por %p119, %p120
    %p122 = scmp.ne.s32.totalorder %s114, %s116
    %p123 = scmp.eq.s32.totalorder %s22, 1
    %p124 = por %p122, %p123
    %p125 = scmp.ne.s32.totalorder %s116, %s117
    %p126 = scmp.eq.s32.totalorder %s22, 0
    %p127 = por %p125, %p126
    %p128 = scmp.ne.s32.totalorder %s116, %s117
    %p129 = scmp.eq.s32.totalorder %s23, 1
    %p130 = por %p128, %p129
    %p132 = scmp.ne.s32.totalorder %s117, %s131
    %p133 = scmp.eq.s32.totalorder %s23, 0
    %p134 = por %p132, %p133
    %s136 = sadd.s32 %s135, 1
    %p139 = scmp.eq.s32.totalorder %s17, 1
    %p140 = scmp.ne.s32.totalorder %s135, %s137
    %p141 = scmp.eq.s32.totalorder %s17, 0
    %p142 = por %p140, %p141
    %p143 = scmp.ne.s32.totalorder %s135, %s137
    %p144 = scmp.eq.s32.totalorder %s22, 1
    %p145 = por %p143, %p144
    %p146 = scmp.ne.s32.totalorder %s137, %s138
    %p147 = scmp.eq.s32.totalorder %s22, 0
    %p148 = por %p146, %p147
    %p149 = scmp.ne.s32.totalorder %s137, %s138
    %p150 = scmp.eq.s32.totalorder %s23, 1
    %p151 = por %p149, %p150
    %p153 = scmp.ne.s32.totalorder %s138, %s152
    %p154 = scmp.eq.s32.totalorder %s23, 0
    %p155 = por %p153, %p154
    %s157 = sadd.s32 %s156, 1
    %p160 = scmp.eq.s32.totalorder %s17, 1
    %p161 = scmp.ne.s32.totalorder %s156, %s158
    %p162 = scmp.eq.s32.totalorder %s17, 0
    %p163 = por %p161, %p162
    %p164 = scmp.ne.s32.totalorder %s156, %s158
    %p165 = scmp.eq.s32.totalorder %s22, 1
    %p166 = por %p164, %p165
    %p167 = scmp.ne.s32.totalorder %s158, %s159
    %p168 = scmp.eq.s32.totalorder %s22, 0
    %p169 = por %p167, %p168
    %p170 = scmp.ne.s32.totalorder %s158, %s159
    %p171 = scmp.eq.s32.totalorder %s23, 1
    %p172 = por %p170, %p171
    %p174 = scmp.ne.s32.totalorder %s159, %s173
    %p175 = scmp.eq.s32.totalorder %s23, 0
    %p176 = por %p174, %p175
    %s178 = sadd.s32 %s177, 1
    %p181 = scmp.eq.s32.totalorder %s17, 1
    %p182 = scmp.ne.s32.totalorder %s177, %s179
    %p183 = scmp.eq.s32.totalorder %s17, 0
    %p184 = por %p182, %p183
    %p185 = scmp.ne.s32.totalorder %s177, %s179
    %p186 = scmp.eq.s32.totalorder %s22, 1
    %p187 = por %p185, %p186
    %p188 = scmp.ne.s32.totalorder %s179, %s180
    %p189 = scmp.eq.s32.totalorder %s22, 0
    %p190 = por %p188, %p189
    %p191 = scmp.ne.s32.totalorder %s179, %s180
    %p192 = scmp.eq.s32.totalorder %s23, 1
    %p193 = por %p191, %p192
    %p195 = scmp.ne.s32.totalorder %s180, %s194
    %p196 = scmp.eq.s32.totalorder %s23, 0
    %p197 = por %p195, %p196
    %s199 = sadd.s32 %s198, 1
    %p202 = scmp.eq.s32.totalorder %s17, 1
    %p203 = scmp.ne.s32.totalorder %s198, %s200
    %p204 = scmp.eq.s32.totalorder %s17, 0
    %p205 = por %p203, %p204
    %p206 = scmp.ne.s32.totalorder %s198, %s200
    %p207 = scmp.eq.s32.totalorder %s22, 1
    %p208 = por %p206, %p207
    %p209 = scmp.ne.s32.totalorder %s200, %s201
    %p210 = scmp.eq.s32.totalorder %s22, 0
    %p211 = por %p209, %p210
    %p212 = scmp.ne.s32.totalorder %s200, %s201
    %p213 = scmp.eq.s32.totalorder %s23, 1
    %p214 = por %p212, %p213
    %p216 = scmp.ne.s32.totalorder %s201, %s215
    %p217 = scmp.eq.s32.totalorder %s23, 0
    %p218 = por %p216, %p217
    %s220 = sadd.s32 %s219, 1
    %p223 = scmp.eq.s32.totalorder %s17, 1
    %p224 = scmp.ne.s32.totalorder %s219, %s221
    %p225 = scmp.eq.s32.totalorder %s17, 0
    %p226 = por %p224, %p225
    %p227 = scmp.ne.s32.totalorder %s219, %s221
    %p228 = scmp.eq.s32.totalorder %s22, 1
    %p229 = por %p227, %p228
    %p230 = scmp.ne.s32.totalorder %s221, %s222
    %p231 = scmp.eq.s32.totalorder %s22, 0
    %p232 = por %p230, %p231
    %p233 = scmp.ne.s32.totalorder %s221, %s222
    %p234 = scmp.eq.s32.totalorder %s23, 1
    %p235 = por %p233, %p234
    %p237 = scmp.ne.s32.totalorder %s222, %s236
    %p238 = scmp.eq.s32.totalorder %s23, 0
    %p239 = por %p237, %p238
    %s241 = sadd.s32 %s240, 1
    %p244 = scmp.eq.s32.totalorder %s17, 1
    %p245 = scmp.ne.s32.totalorder %s240, %s242
    %p246 = scmp.eq.s32.totalorder %s17, 0
    %p247 = por %p245, %p246
    %p248 = scmp.ne.s32.totalorder %s240, %s242
    %p249 = scmp.eq.s32.totalorder %s22, 1
    %p250 = por %p248, %p249
    %p251 = scmp.ne.s32.totalorder %s242, %s243
    %p252 = scmp.eq.s32.totalorder %s22, 0
    %p253 = por %p251, %p252
    %p254 = scmp.ne.s32.totalorder %s242, %s243
    %p255 = scmp.eq.s32.totalorder %s23, 1
    %p256 = por %p254, %p255
    %p258 = scmp.ne.s32.totalorder %s243, %s257
    %p259 = scmp.eq.s32.totalorder %s23, 0
    %p260 = por %p258, %p259
    %s261 = ssub.s32 %s17, %s24
    %p262 = scmp.eq.s32.totalorder %s261, 0
    %s264 = sadd.s32 %s263, 1
    %s265 = scalar_select %p262, %s263, %s264
    %p268 = pneg %p262
    %p269 = scmp.eq.s32.totalorder %s17, 1
    %p270 = por %p268, %p269
    %p271 = scmp.ne.s32.totalorder %s263, %s266
    %p272 = scmp.eq.s32.totalorder %s17, 0
    %p273 = por %p271, %p272
    %p274 = scmp.ne.s32.totalorder %s263, %s266
    %p275 = scmp.eq.s32.totalorder %s22, 1
    %p276 = por %p274, %p275
    %p277 = scmp.ne.s32.totalorder %s266, %s267
    %p278 = scmp.eq.s32.totalorder %s22, 0
    %p279 = por %p277, %p278
    %p280 = scmp.ne.s32.totalorder %s266, %s267
    %p281 = scmp.eq.s32.totalorder %s23, 1
    %p282 = por %p280, %p281
    %p284 = scmp.ne.s32.totalorder %s267, %s283
    %p285 = scmp.eq.s32.totalorder %s23, 0
    %p286 = por %p284, %p285
    %p287 = scmp.le.s32.totalorder 1, %s17
    %p288 = scmp.lt.s32.totalorder %s17, 3
    %p289 = pnand %p287, %p288
    %p290 = pneg %p289
    // Predicated region
    $region9: #{t_stconv_forward.1} parent=5 // pred_check
      _
    $region10: #{t_stconv_forward.1} parent=5 // pred_check_branch
      %292 = sbr.rel (%p289) target = $region12
    $region11: #{t_stconv_forward.1} parent=5 // pred_region
      %s293 = ssub.s32 %s17, 1
      // Predicated region
      $region13: #{t_stconv_forward.1} parent=11 // pred_check
        %p294 = pneg %p64
      $region14: #{t_stconv_forward.1} parent=11 // pred_check_branch
        %296 = sbr.rel (%p294) target = $region16
      $region15: #{t_stconv_forward.1} parent=11 // pred_region
        _
      $region16: #{t_stconv_forward.1} parent=11 // pred_fallthru
        _
      // Predicated region
      $region17: #{t_stconv_forward.1} parent=11 // pred_check
        %p297 = pneg %p85
      $region18: #{t_stconv_forward.1} parent=11 // pred_check_branch
        %299 = sbr.rel (%p297) target = $region20
      $region19: #{t_stconv_forward.1} parent=11 // pred_region
        _
      $region20: #{t_stconv_forward.1} parent=11 // pred_fallthru
        _
      // Predicated region
      $region21: #{t_stconv_forward.1} parent=11 // pred_check
        %p300 = pneg %p106
      $region22: #{t_stconv_forward.1} parent=11 // pred_check_branch
        %302 = sbr.rel (%p300) target = $region24
      $region23: #{t_stconv_forward.1} parent=11 // pred_region
        _
      $region24: #{t_stconv_forward.1} parent=11 // pred_fallthru
        _
      // Predicated region
      $region25: #{t_stconv_forward.1} parent=11 // pred_check
        %p303 = pneg %p127
      $region26: #{t_stconv_forward.1} parent=11 // pred_check_branch
        %305 = sbr.rel (%p303) target = $region28
      $region27: #{t_stconv_forward.1} parent=11 // pred_region
        _
      $region28: #{t_stconv_forward.1} parent=11 // pred_fallthru
        _
      // Predicated region
      $region29: #{t_stconv_forward.1} parent=11 // pred_check
        %p306 = pneg %p148
      $region30: #{t_stconv_forward.1} parent=11 // pred_check_branch
        %308 = sbr.rel (%p306) target = $region32
      $region31: #{t_stconv_forward.1} parent=11 // pred_region
        _
      $region32: #{t_stconv_forward.1} parent=11 // pred_fallthru
        _
      // Predicated region
      $region33: #{t_stconv_forward.1} parent=11 // pred_check
        %p309 = pneg %p169
      $region34: #{t_stconv_forward.1} parent=11 // pred_check_branch
        %311 = sbr.rel (%p309) target = $region36
      $region35: #{t_stconv_forward.1} parent=11 // pred_region
        _
      $region36: #{t_stconv_forward.1} parent=11 // pred_fallthru
        _
      // Predicated region
      $region37: #{t_stconv_forward.1} parent=11 // pred_check
        %p312 = pneg %p190
      $region38: #{t_stconv_forward.1} parent=11 // pred_check_branch
        %314 = sbr.rel (%p312) target = $region40
      $region39: #{t_stconv_forward.1} parent=11 // pred_region
        _
      $region40: #{t_stconv_forward.1} parent=11 // pred_fallthru
        _
      // Predicated region
      $region41: #{t_stconv_forward.1} parent=11 // pred_check
        %p315 = pneg %p211
      $region42: #{t_stconv_forward.1} parent=11 // pred_check_branch
        %317 = sbr.rel (%p315) target = $region44
      $region43: #{t_stconv_forward.1} parent=11 // pred_region
        _
      $region44: #{t_stconv_forward.1} parent=11 // pred_fallthru
        _
      // Predicated region
      $region45: #{t_stconv_forward.1} parent=11 // pred_check
        %p318 = pneg %p232
      $region46: #{t_stconv_forward.1} parent=11 // pred_check_branch
        %320 = sbr.rel (%p318) target = $region48
      $region47: #{t_stconv_forward.1} parent=11 // pred_region
        _
      $region48: #{t_stconv_forward.1} parent=11 // pred_fallthru
        _
      // Predicated region
      $region49: #{t_stconv_forward.1} parent=11 // pred_check
        %p321 = pneg %p253
      $region50: #{t_stconv_forward.1} parent=11 // pred_check_branch
        %323 = sbr.rel (%p321) target = $region52
      $region51: #{t_stconv_forward.1} parent=11 // pred_region
        _
      $region52: #{t_stconv_forward.1} parent=11 // pred_fallthru
        _
    $region12: #{t_stconv_forward.1} parent=5 // pred_fallthru
      _
    %p324 = scmp.lt.s32.totalorder %s17, 2
    // Predicated region
    $region53: #{t_stconv_forward.1} parent=5 // pred_check
      %p325 = pneg %p324
    $region54: #{t_stconv_forward.1} parent=5 // pred_check_branch
      %327 = sbr.rel (%p325) target = $region56
    $region55: #{t_stconv_forward.1} parent=5 // pred_region
      // Predicated region
      $region57: #{t_stconv_forward.1} parent=55 // pred_check
        %p328 = pneg %p37
      $region58: #{t_stconv_forward.1} parent=55 // pred_check_branch
        %330 = sbr.rel (%p328) target = $region60
      $region59: #{t_stconv_forward.1} parent=55 // pred_region
        %p331 = scmp.lt.s32.totalorder %s17, 1
        %s332 = scalar_select %p331, %s17, 1
        %s333 = smul.addr %s332, 24
        %s334 = smul.addr %s333, 4
        %s335 = scalar_lea.vmem %s0, %s334
      $region60: #{t_stconv_forward.1} parent=55 // pred_fallthru
        _
    $region56: #{t_stconv_forward.1} parent=5 // pred_fallthru
      _
    %p336 = scmp.le.s32.totalorder 1, %s17
    %p337 = scmp.lt.s32.totalorder %s17, 3
    %p338 = pnand %p336, %p337
    %p339 = pneg %p338
    // Predicated region
    $region61: #{t_stconv_forward.1} parent=5 // pred_check
      _
    $region62: #{t_stconv_forward.1} parent=5 // pred_check_branch
      %341 = sbr.rel (%p338) target = $region64
    $region63: #{t_stconv_forward.1} parent=5 // pred_region
      %s342 = ssub.s32 %s17, 1
      %p343 = scmp.lt.s32.totalorder %s22, 1
      %s344 = scalar_select %p343, %s22, 1
      %s345 = smul.addr %s344, 24
      %s346 = smul.addr %s345, 4
      %s347 = scalar_lea.vmem %s0, %s346
      %p348 = pneg %p43
      %p349 = pneg %p40
      %p350 = pneg %p64
      %p351 = pneg %p61
      %p352 = pneg %p85
      %p353 = pneg %p82
      %p354 = pneg %p106
      %p355 = pneg %p103
      %p356 = pneg %p127
      %p357 = pneg %p124
      %p358 = pneg %p148
      %p359 = pneg %p145
      %p360 = pneg %p169
      %p361 = pneg %p166
      %p362 = pneg %p190
      %p363 = pneg %p187
      %p364 = pneg %p211
      %p365 = pneg %p208
      %p366 = pneg %p232
      %p367 = pneg %p229
      %p368 = pneg %p253
      %p369 = pneg %p250
      %p370 = pneg %p279
      %p371 = pneg %p276
      %p372 = scmp.lt.s32.totalorder %s22, 1
      %s373 = scalar_select %p372, %s22, 1
      %s374 = smul.addr %s373, 2
      %s375 = smul.addr %s374, 8
      %s376 = scalar_lea.vmem %s11, %s375
      %p377 = scmp.lt.s32.totalorder %s22, 1
      %s378 = scalar_select %p377, %s22, 1
      %s379 = smul.addr %s378, 24
      %s380 = smul.addr %s379, 4
      %s381 = scalar_lea.vmem %s0, %s380
      %p382 = scmp.lt.s32.totalorder %s22, 1
      %s383 = scalar_select %p382, %s22, 1
      %s384 = smul.addr %s383, 2
      %s385 = smul.addr %s384, 8
      %s386 = scalar_lea.vmem %s11, %s385
      %v388 = vld [vmem:[%s381] sm:$0xf]
      %v389 = vld [vmem:[%s381 + $0x4] sm:$0xf]
      %v390 = vld [vmem:[%s381 + $0x8] sm:$0xf]
      %v391 = vld [vmem:[%s381 + $0xc] sm:$0xf]
      %v392 = vld [vmem:[%s381 + $0x10] sm:$0xf]
      %v393 = vld [vmem:[%s381 + $0x14] sm:$0xf]
      %v394 = vld [vmem:[%s381 + $0x18] sm:$0xf]
      %v395 = vld [vmem:[%s381 + $0x1c] sm:$0xf]
      %v396 = vld [vmem:[%s381 + $0x20] sm:$0xf]
      %v397 = vld [vmem:[%s381 + $0x24] sm:$0xf]
      %v398 = vld [vmem:[%s381 + $0x28] sm:$0xf]
      %v399 = vld [vmem:[%s381 + $0x2c] sm:$0xf]
      %v400 = vld [vmem:[%s381 + $0x30] sm:$0xf]
      %v401 = vld [vmem:[%s381 + $0x34] sm:$0xf]
      %v402 = vld [vmem:[%s381 + $0x38] sm:$0xf]
      %v403 = vld [vmem:[%s381 + $0x3c] sm:$0xf]
      %v404 = vld [vmem:[%s381 + $0x40] sm:$0xf]
      %v405 = vld [vmem:[%s381 + $0x44] sm:$0xf]
      %v406 = vld [vmem:[%s381 + $0x48] sm:$0xf]
      %v407 = vld [vmem:[%s381 + $0x4c] sm:$0xf]
      %v408 = vld [vmem:[%s381 + $0x50] sm:$0xf]
      %v409 = vld [vmem:[%s381 + $0x54] sm:$0xf]
      %v410 = vld [vmem:[%s381 + $0x58] sm:$0xf]
      %v411 = vld [vmem:[%s381 + $0x5c] sm:$0xf]
      %v412 = vld [vmem:[%s2] sm:$0xf]
      %v413 = vld [vmem:[%s2 + $0x4] sm:$0x3]
      %v414 = vld [vmem:[%s3] sm:$0x1]
      %v416 = vlaneseq
      %v417 = vshrl.u32 %v416, 7
      %v418 = vsub.s32 0, %v417
      %v419 = vrot.slane %v414, %v418
      %v445 = vunpack.c.l.b16 %v388
      %v446 = vunpack.c.l.b16 %v389
      %v447 = vunpack.c.l.b16 %v390
      %v448 = vunpack.c.l.b16 %v391
      %v449 = vunpack.c.l.b16 %v392
      %v450 = vunpack.c.l.b16 %v393
      %v451 = vunpack.c.l.b16 %v394
      %v452 = vunpack.c.l.b16 %v395
      %v453 = vunpack.c.l.b16 %v396
      %v454 = vunpack.c.l.b16 %v397
      %v455 = vunpack.c.l.b16 %v398
      %v456 = vunpack.c.l.b16 %v399
      %v457 = vunpack.c.l.b16 %v400
      %v458 = vunpack.c.l.b16 %v401
      %v459 = vunpack.c.l.b16 %v402
      %v460 = vunpack.c.l.b16 %v403
      %v461 = vunpack.c.l.b16 %v404
      %v462 = vunpack.c.l.b16 %v405
      %v463 = vunpack.c.l.b16 %v406
      %v464 = vunpack.c.l.b16 %v407
      %v465 = vunpack.c.l.b16 %v408
      %v466 = vunpack.c.l.b16 %v409
      %v467 = vunpack.c.l.b16 %v410
      %v468 = vunpack.c.l.b16 %v411
      %v469 = vpack.c.b16 %v446, %v445
      %v470 = vpack.c.b16 %v448, %v447
      %v471 = vpack.c.b16 %v450, %v449
      %v472 = vpack.c.b16 %v452, %v451
      %v473 = vpack.c.b16 %v454, %v453
      %v474 = vpack.c.b16 %v456, %v455
      %v475 = vpack.c.b16 %v458, %v457
      %v476 = vpack.c.b16 %v460, %v459
      %v477 = vpack.c.b16 %v462, %v461
      %v478 = vpack.c.b16 %v464, %v463
      %v479 = vpack.c.b16 %v466, %v465
      %v480 = vpack.c.b16 %v468, %v467
      %v483 = vunpack.c.l.b16 %v412
      %v484 = vunpack.c.l.b16 %v413
      %v485 = vpack.c.b16 %v484, %v483
      %vm486 = vcmask 97280
      %v488 = vsel %vm486, %v469, 0
      %v491 = vsel %vm486, %v470, 0
      %v494 = vsel %vm486, %v471, 0
      %v497 = vsel %vm486, %v472, 0
      %v500 = vsel %vm486, %v473, 0
      %v503 = vsel %vm486, %v474, 0
      %v506 = vsel %vm486, %v475, 0
      %v509 = vsel %vm486, %v476, 0
      %v512 = vsel %vm486, %v477, 0
      %v515 = vsel %vm486, %v478, 0
      %v518 = vsel %vm486, %v479, 0
      %v521 = vsel %vm486, %v480, 0
      %vm523 = vcmask 1045504
      %v525 = vsel %vm523, %v485, 0
      %527 = vmatprep.subr.bf16.mxu0 0
      %528 = vmatpush1.bf16.msra.mxu0 0
      %529 = vmatprep.subr.bf16.mxu0 0
      %530 = vmatpush1.bf16.msra.mxu0 0
      %531 = vmatprep.subr.bf16.mxu0 0
      %532 = vmatpush1.bf16.msra.mxu0 0
      %533 = vmatprep.subr.bf16.mxu0 0
      %534 = vmatpush1.bf16.msra.mxu0 0
      %535 = vmatprep.subr.bf16.mxu0 0
      %536 = vmatpush1.bf16.msra.mxu0 0
      %537 = vmatprep.subr.bf16.mxu0 0
      %538 = vmatpush1.bf16.msra.mxu0 0
      %539 = vmatprep.subr.bf16.mxu0 0
      %540 = vmatpush1.bf16.msra.mxu0 0
      %541 = vmatprep.subr.bf16.mxu0 0
      %542 = vmatpush1.bf16.msra.mxu0 %v525
      %543 = vmatprep.subr.bf16.mxu0 0
      %544 = vmatpush2.bf16.msra.mxu0 0
      %545 = vmatprep.subr.bf16.mxu0 0
      %546 = vmatpush2.bf16.msra.mxu0 0
      %547 = vmatprep.subr.bf16.mxu0 0
      %548 = vmatpush2.bf16.msra.mxu0 0
      %549 = vmatprep.subr.bf16.mxu0 0
      %550 = vmatpush2.bf16.msra.mxu0 0
      %551 = vmatprep.subr.bf16.mxu0 0
      %552 = vmatpush2.bf16.msra.mxu0 0
      %553 = vmatprep.subr.bf16.mxu0 0
      %554 = vmatpush2.bf16.msra.mxu0 0
      %555 = vmatprep.subr.bf16.mxu0 0
      %556 = vmatpush2.bf16.msra.mxu0 0
      %557 = vmatprep.subr.bf16.mxu0 0
      %558 = vmatpush2.bf16.msra.mxu0 0
      %559 = vmatprep.mubr.bf16.mxu0 0
      %560 = vmatmul.mubr.bf16.gmra.mxu0 %v488
      %v561 = vpop.f32.mrf.mxu0
      %v562 = vadd.f32 %v419, %v561
      %v563 = vpop.f32.mrf.mxu0
      %v564 = vpop.f32.mrf.mxu0
      %v565 = vadd.f32 %v419, %v564
      %v566 = vpop.f32.mrf.mxu0
      %567 = vmatprep.mubr.bf16.mxu0 0
      %568 = vmatmul.mubr.bf16.gmra.mxu0 %v491
      %v569 = vpop.f32.mrf.mxu0
      %v570 = vadd.f32 %v419, %v569
      %v571 = vpop.f32.mrf.mxu0
      %v572 = vpop.f32.mrf.mxu0
      %v573 = vadd.f32 %v419, %v572
      %v574 = vpop.f32.mrf.mxu0
      %575 = vmatprep.mubr.bf16.mxu0 0
      %576 = vmatmul.mubr.bf16.gmra.mxu0 %v494
      %v577 = vpop.f32.mrf.mxu0
      %v578 = vadd.f32 %v419, %v577
      %v579 = vpop.f32.mrf.mxu0
      %v580 = vpop.f32.mrf.mxu0
      %v581 = vadd.f32 %v419, %v580
      %v582 = vpop.f32.mrf.mxu0
      %583 = vmatprep.mubr.bf16.mxu0 0
      %584 = vmatmul.mubr.bf16.gmra.mxu0 %v497
      %v585 = vpop.f32.mrf.mxu0
      %v586 = vadd.f32 %v419, %v585
      %v587 = vpop.f32.mrf.mxu0
      %v588 = vpop.f32.mrf.mxu0
      %v589 = vadd.f32 %v419, %v588
      %v590 = vpop.f32.mrf.mxu0
      %591 = vmatprep.mubr.bf16.mxu0 0
      %592 = vmatmul.mubr.bf16.gmra.mxu0 %v500
      %v593 = vpop.f32.mrf.mxu0
      %v594 = vadd.f32 %v419, %v593
      %v595 = vpop.f32.mrf.mxu0
      %v596 = vpop.f32.mrf.mxu0
      %v597 = vadd.f32 %v419, %v596
      %v598 = vpop.f32.mrf.mxu0
      %599 = vmatprep.mubr.bf16.mxu0 0
      %600 = vmatmul.mubr.bf16.gmra.mxu0 %v503
      %v601 = vpop.f32.mrf.mxu0
      %v602 = vadd.f32 %v419, %v601
      %v603 = vpop.f32.mrf.mxu0
      %v604 = vpop.f32.mrf.mxu0
      %v605 = vadd.f32 %v419, %v604
      %v606 = vpop.f32.mrf.mxu0
      %607 = vmatprep.mubr.bf16.mxu0 0
      %608 = vmatmul.mubr.bf16.gmra.mxu0 %v506
      %v609 = vpop.f32.mrf.mxu0
      %v610 = vadd.f32 %v419, %v609
      %v611 = vpop.f32.mrf.mxu0
      %v612 = vpop.f32.mrf.mxu0
      %v613 = vadd.f32 %v419, %v612
      %v614 = vpop.f32.mrf.mxu0
      %615 = vmatprep.mubr.bf16.mxu0 0
      %616 = vmatmul.mubr.bf16.gmra.mxu0 %v509
      %v617 = vpop.f32.mrf.mxu0
      %v618 = vadd.f32 %v419, %v617
      %v619 = vpop.f32.mrf.mxu0
      %v620 = vpop.f32.mrf.mxu0
      %v621 = vadd.f32 %v419, %v620
      %v622 = vpop.f32.mrf.mxu0
      %623 = vmatprep.mubr.bf16.mxu0 0
      %624 = vmatmul.mubr.bf16.gmra.mxu0 %v512
      %v625 = vpop.f32.mrf.mxu0
      %v626 = vadd.f32 %v419, %v625
      %v627 = vpop.f32.mrf.mxu0
      %v628 = vpop.f32.mrf.mxu0
      %v629 = vadd.f32 %v419, %v628
      %v630 = vpop.f32.mrf.mxu0
      %631 = vmatprep.mubr.bf16.mxu0 0
      %632 = vmatmul.mubr.bf16.gmra.mxu0 %v515
      %v633 = vpop.f32.mrf.mxu0
      %v634 = vadd.f32 %v419, %v633
      %v635 = vpop.f32.mrf.mxu0
      %v636 = vpop.f32.mrf.mxu0
      %v637 = vadd.f32 %v419, %v636
      %v638 = vpop.f32.mrf.mxu0
      %639 = vmatprep.mubr.bf16.mxu0 0
      %640 = vmatmul.mubr.bf16.gmra.mxu0 %v518
      %v641 = vpop.f32.mrf.mxu0
      %v642 = vadd.f32 %v419, %v641
      %v643 = vpop.f32.mrf.mxu0
      %v644 = vpop.f32.mrf.mxu0
      %v645 = vadd.f32 %v419, %v644
      %v646 = vpop.f32.mrf.mxu0
      %647 = vmatprep.mubr.bf16.mxu0 0
      %648 = vmatmul.mubr.bf16.gmra.mxu0 %v521
      %v649 = vpop.f32.mrf.mxu0
      %v650 = vadd.f32 %v419, %v649
      %v651 = vpop.f32.mrf.mxu0
      %v652 = vpop.f32.mrf.mxu0
      %v653 = vadd.f32 %v419, %v652
      %v654 = vpop.f32.mrf.mxu0
      %655 = vdwg.mxu0
      %v656 = vxor.u32 %v562, 2147483648
      %v657 = vxor.u32 %v565, 2147483648
      %v658 = vxor.u32 %v570, 2147483648
      %v659 = vxor.u32 %v573, 2147483648
      %v660 = vxor.u32 %v578, 2147483648
      %v661 = vxor.u32 %v581, 2147483648
      %v662 = vxor.u32 %v586, 2147483648
      %v663 = vxor.u32 %v589, 2147483648
      %v664 = vxor.u32 %v594, 2147483648
      %v665 = vxor.u32 %v597, 2147483648
      %v666 = vxor.u32 %v602, 2147483648
      %v667 = vxor.u32 %v605, 2147483648
      %v668 = vxor.u32 %v610, 2147483648
      %v669 = vxor.u32 %v613, 2147483648
      %v670 = vxor.u32 %v618, 2147483648
      %v671 = vxor.u32 %v621, 2147483648
      %v672 = vxor.u32 %v626, 2147483648
      %v673 = vxor.u32 %v629, 2147483648
      %v674 = vxor.u32 %v634, 2147483648
      %v675 = vxor.u32 %v637, 2147483648
      %v676 = vxor.u32 %v642, 2147483648
      %v677 = vxor.u32 %v645, 2147483648
      %v678 = vxor.u32 %v650, 2147483648
      %v679 = vxor.u32 %v653, 2147483648
      %v680 = vmul.f32 %v656, 1.442695
      %v681 = vpow.pop %v680
      %v682 = vmul.f32 %v657, 1.442695
      %v683 = vpow.pop %v682
      %v684 = vmul.f32 %v658, 1.442695
      %v685 = vpow.pop %v684
      %v686 = vmul.f32 %v659, 1.442695
      %v687 = vpow.pop %v686
      %v688 = vmul.f32 %v660, 1.442695
      %v689 = vpow.pop %v688
      %v690 = vmul.f32 %v661, 1.442695
      %v691 = vpow.pop %v690
      %v692 = vmul.f32 %v662, 1.442695
      %v693 = vpow.pop %v692
      %v694 = vmul.f32 %v663, 1.442695
      %v695 = vpow.pop %v694
      %v696 = vmul.f32 %v664, 1.442695
      %v697 = vpow.pop %v696
      %v698 = vmul.f32 %v665, 1.442695
      %v699 = vpow.pop %v698
      %v700 = vmul.f32 %v666, 1.442695
      %v701 = vpow.pop %v700
      %v702 = vmul.f32 %v667, 1.442695
      %v703 = vpow.pop %v702
      %v704 = vmul.f32 %v668, 1.442695
      %v705 = vpow.pop %v704
      %v706 = vmul.f32 %v669, 1.442695
      %v707 = vpow.pop %v706
      %v708 = vmul.f32 %v670, 1.442695
      %v709 = vpow.pop %v708
      %v710 = vmul.f32 %v671, 1.442695
      %v711 = vpow.pop %v710
      %v712 = vmul.f32 %v672, 1.442695
      %v713 = vpow.pop %v712
      %v714 = vmul.f32 %v673, 1.442695
      %v715 = vpow.pop %v714
      %v716 = vmul.f32 %v674, 1.442695
      %v717 = vpow.pop %v716
      %v718 = vmul.f32 %v675, 1.442695
      %v719 = vpow.pop %v718
      %v720 = vmul.f32 %v676, 1.442695
      %v721 = vpow.pop %v720
      %v722 = vmul.f32 %v677, 1.442695
      %v723 = vpow.pop %v722
      %v724 = vmul.f32 %v678, 1.442695
      %v725 = vpow.pop %v724
      %v726 = vmul.f32 %v679, 1.442695
      %v727 = vpow.pop %v726
      %v728 = vadd.f32 %v681, 1.0
      %v729 = vadd.f32 %v683, 1.0
      %v730 = vadd.f32 %v685, 1.0
      %v731 = vadd.f32 %v687, 1.0
      %v732 = vadd.f32 %v689, 1.0
      %v733 = vadd.f32 %v691, 1.0
      %v734 = vadd.f32 %v693, 1.0
      %v735 = vadd.f32 %v695, 1.0
      %v736 = vadd.f32 %v697, 1.0
      %v737 = vadd.f32 %v699, 1.0
      %v738 = vadd.f32 %v701, 1.0
      %v739 = vadd.f32 %v703, 1.0
      %v740 = vadd.f32 %v705, 1.0
      %v741 = vadd.f32 %v707, 1.0
      %v742 = vadd.f32 %v709, 1.0
      %v743 = vadd.f32 %v711, 1.0
      %v744 = vadd.f32 %v713, 1.0
      %v745 = vadd.f32 %v715, 1.0
      %v746 = vadd.f32 %v717, 1.0
      %v747 = vadd.f32 %v719, 1.0
      %v748 = vadd.f32 %v721, 1.0
      %v749 = vadd.f32 %v723, 1.0
      %v750 = vadd.f32 %v725, 1.0
      %v751 = vadd.f32 %v727, 1.0
      %v752 = vrcp.pop %v728
      %v753 = vmul.f32 1.0, %v752
      %v754 = vrcp.pop %v729
      %v755 = vmul.f32 1.0, %v754
      %v756 = vrcp.pop %v730
      %v757 = vmul.f32 1.0, %v756
      %v758 = vrcp.pop %v731
      %v759 = vmul.f32 1.0, %v758
      %v760 = vrcp.pop %v732
      %v761 = vmul.f32 1.0, %v760
      %v762 = vrcp.pop %v733
      %v763 = vmul.f32 1.0, %v762
      %v764 = vrcp.pop %v734
      %v765 = vmul.f32 1.0, %v764
      %v766 = vrcp.pop %v735
      %v767 = vmul.f32 1.0, %v766
      %v768 = vrcp.pop %v736
      %v769 = vmul.f32 1.0, %v768
      %v770 = vrcp.pop %v737
      %v771 = vmul.f32 1.0, %v770
      %v772 = vrcp.pop %v738
      %v773 = vmul.f32 1.0, %v772
      %v774 = vrcp.pop %v739
      %v775 = vmul.f32 1.0, %v774
      %v776 = vrcp.pop %v740
      %v777 = vmul.f32 1.0, %v776
      %v778 = vrcp.pop %v741
      %v779 = vmul.f32 1.0, %v778
      %v780 = vrcp.pop %v742
      %v781 = vmul.f32 1.0, %v780
      %v782 = vrcp.pop %v743
      %v783 = vmul.f32 1.0, %v782
      %v784 = vrcp.pop %v744
      %v785 = vmul.f32 1.0, %v784
      %v786 = vrcp.pop %v745
      %v787 = vmul.f32 1.0, %v786
      %v788 = vrcp.pop %v746
      %v789 = vmul.f32 1.0, %v788
      %v790 = vrcp.pop %v747
      %v791 = vmul.f32 1.0, %v790
      %v792 = vrcp.pop %v748
      %v793 = vmul.f32 1.0, %v792
      %v794 = vrcp.pop %v749
      %v795 = vmul.f32 1.0, %v794
      %v796 = vrcp.pop %v750
      %v797 = vmul.f32 1.0, %v796
      %v798 = vrcp.pop %v751
      %v799 = vmul.f32 1.0, %v798
      %824 = vrot.lane.b32.xlu0 %v753, 96
      %v825 = vpop.permute.xlu0 %824
      %826 = vrot.lane.b32.xlu0 %v755, 96
      %v827 = vpop.permute.xlu0 %826
      %828 = vrot.lane.b32.xlu0 %v757, 96
      %v829 = vpop.permute.xlu0 %828
      %830 = vrot.lane.b32.xlu0 %v759, 96
      %v831 = vpop.permute.xlu0 %830
      %832 = vrot.lane.b32.xlu0 %v761, 96
      %v833 = vpop.permute.xlu0 %832
      %834 = vrot.lane.b32.xlu0 %v763, 96
      %v835 = vpop.permute.xlu0 %834
      %836 = vrot.lane.b32.xlu0 %v765, 96
      %v837 = vpop.permute.xlu0 %836
      %838 = vrot.lane.b32.xlu0 %v767, 96
      %v839 = vpop.permute.xlu0 %838
      %840 = vrot.lane.b32.xlu0 %v769, 96
      %v841 = vpop.permute.xlu0 %840
      %842 = vrot.lane.b32.xlu0 %v771, 96
      %v843 = vpop.permute.xlu0 %842
      %844 = vrot.lane.b32.xlu0 %v773, 96
      %v845 = vpop.permute.xlu0 %844
      %846 = vrot.lane.b32.xlu0 %v775, 96
      %v847 = vpop.permute.xlu0 %846
      %848 = vrot.lane.b32.xlu0 %v777, 96
      %v849 = vpop.permute.xlu0 %848
      %850 = vrot.lane.b32.xlu0 %v779, 96
      %v851 = vpop.permute.xlu0 %850
      %852 = vrot.lane.b32.xlu0 %v781, 96
      %v853 = vpop.permute.xlu0 %852
      %854 = vrot.lane.b32.xlu0 %v783, 96
      %v855 = vpop.permute.xlu0 %854
      %856 = vrot.lane.b32.xlu0 %v785, 96
      %v857 = vpop.permute.xlu0 %856
      %858 = vrot.lane.b32.xlu0 %v787, 96
      %v859 = vpop.permute.xlu0 %858
      %860 = vrot.lane.b32.xlu0 %v789, 96
      %v861 = vpop.permute.xlu0 %860
      %862 = vrot.lane.b32.xlu0 %v791, 96
      %v863 = vpop.permute.xlu0 %862
      %864 = vrot.lane.b32.xlu0 %v793, 96
      %v865 = vpop.permute.xlu0 %864
      %866 = vrot.lane.b32.xlu0 %v795, 96
      %v867 = vpop.permute.xlu0 %866
      %868 = vrot.lane.b32.xlu0 %v797, 96
      %v869 = vpop.permute.xlu0 %868
      %870 = vrot.lane.b32.xlu0 %v799, 96
      %v871 = vpop.permute.xlu0 %870
      %v896 = vmul.f32 %v562, %v825
      %v897 = vmul.f32 %v565, %v827
      %v898 = vmul.f32 %v570, %v829
      %v899 = vmul.f32 %v573, %v831
      %v900 = vmul.f32 %v578, %v833
      %v901 = vmul.f32 %v581, %v835
      %v902 = vmul.f32 %v586, %v837
      %v903 = vmul.f32 %v589, %v839
      %v904 = vmul.f32 %v594, %v841
      %v905 = vmul.f32 %v597, %v843
      %v906 = vmul.f32 %v602, %v845
      %v907 = vmul.f32 %v605, %v847
      %v908 = vmul.f32 %v610, %v849
      %v909 = vmul.f32 %v613, %v851
      %v910 = vmul.f32 %v618, %v853
      %v911 = vmul.f32 %v621, %v855
      %v912 = vmul.f32 %v626, %v857
      %v913 = vmul.f32 %v629, %v859
      %v914 = vmul.f32 %v634, %v861
      %v915 = vmul.f32 %v637, %v863
      %v916 = vmul.f32 %v642, %v865
      %v917 = vmul.f32 %v645, %v867
      %v918 = vmul.f32 %v650, %v869
      %v919 = vmul.f32 %v653, %v871
      %944 = vrot.lane.b32.xlu0 %v562, 64
      %v945 = vpop.permute.xlu0 %944
      %946 = vrot.lane.b32.xlu0 %v565, 64
      %v947 = vpop.permute.xlu0 %946
      %948 = vrot.lane.b32.xlu0 %v570, 64
      %v949 = vpop.permute.xlu0 %948
      %950 = vrot.lane.b32.xlu0 %v573, 64
      %v951 = vpop.permute.xlu0 %950
      %952 = vrot.lane.b32.xlu0 %v578, 64
      %v953 = vpop.permute.xlu0 %952
      %954 = vrot.lane.b32.xlu0 %v581, 64
      %v955 = vpop.permute.xlu0 %954
      %956 = vrot.lane.b32.xlu0 %v586, 64
      %v957 = vpop.permute.xlu0 %956
      %958 = vrot.lane.b32.xlu0 %v589, 64
      %v959 = vpop.permute.xlu0 %958
      %960 = vrot.lane.b32.xlu0 %v594, 64
      %v961 = vpop.permute.xlu0 %960
      %962 = vrot.lane.b32.xlu0 %v597, 64
      %v963 = vpop.permute.xlu0 %962
      %964 = vrot.lane.b32.xlu0 %v602, 64
      %v965 = vpop.permute.xlu0 %964
      %966 = vrot.lane.b32.xlu0 %v605, 64
      %v967 = vpop.permute.xlu0 %966
      %968 = vrot.lane.b32.xlu0 %v610, 64
      %v969 = vpop.permute.xlu0 %968
      %970 = vrot.lane.b32.xlu0 %v613, 64
      %v971 = vpop.permute.xlu0 %970
      %972 = vrot.lane.b32.xlu0 %v618, 64
      %v973 = vpop.permute.xlu0 %972
      %974 = vrot.lane.b32.xlu0 %v621, 64
      %v975 = vpop.permute.xlu0 %974
      %976 = vrot.lane.b32.xlu0 %v626, 64
      %v977 = vpop.permute.xlu0 %976
      %978 = vrot.lane.b32.xlu0 %v629, 64
      %v979 = vpop.permute.xlu0 %978
      %980 = vrot.lane.b32.xlu0 %v634, 64
      %v981 = vpop.permute.xlu0 %980
      %982 = vrot.lane.b32.xlu0 %v637, 64
      %v983 = vpop.permute.xlu0 %982
      %984 = vrot.lane.b32.xlu0 %v642, 64
      %v985 = vpop.permute.xlu0 %984
      %986 = vrot.lane.b32.xlu0 %v645, 64
      %v987 = vpop.permute.xlu0 %986
      %988 = vrot.lane.b32.xlu0 %v650, 64
      %v989 = vpop.permute.xlu0 %988
      %990 = vrot.lane.b32.xlu0 %v653, 64
      %v991 = vpop.permute.xlu0 %990
      %v1016 = vadd.f32 %v896, %v945
      %v1017 = vadd.f32 %v897, %v947
      %v1018 = vadd.f32 %v898, %v949
      %v1019 = vadd.f32 %v899, %v951
      %v1020 = vadd.f32 %v900, %v953
      %v1021 = vadd.f32 %v901, %v955
      %v1022 = vadd.f32 %v902, %v957
      %v1023 = vadd.f32 %v903, %v959
      %v1024 = vadd.f32 %v904, %v961
      %v1025 = vadd.f32 %v905, %v963
      %v1026 = vadd.f32 %v906, %v965
      %v1027 = vadd.f32 %v907, %v967
      %v1028 = vadd.f32 %v908, %v969
      %v1029 = vadd.f32 %v909, %v971
      %v1030 = vadd.f32 %v910, %v973
      %v1031 = vadd.f32 %v911, %v975
      %v1032 = vadd.f32 %v912, %v977
      %v1033 = vadd.f32 %v913, %v979
      %v1034 = vadd.f32 %v914, %v981
      %v1035 = vadd.f32 %v915, %v983
      %v1036 = vadd.f32 %v916, %v985
      %v1037 = vadd.f32 %v917, %v987
      %v1038 = vadd.f32 %v918, %v989
      %v1039 = vadd.f32 %v919, %v991
      %v1040 = vmax.f32 %v1016, 0.0
      %v1041 = vmax.f32 %v1017, 0.0
      %v1042 = vmax.f32 %v1018, 0.0
      %v1043 = vmax.f32 %v1019, 0.0
      %v1044 = vmax.f32 %v1020, 0.0
      %v1045 = vmax.f32 %v1021, 0.0
      %v1046 = vmax.f32 %v1022, 0.0
      %v1047 = vmax.f32 %v1023, 0.0
      %v1048 = vmax.f32 %v1024, 0.0
      %v1049 = vmax.f32 %v1025, 0.0
      %v1050 = vmax.f32 %v1026, 0.0
      %v1051 = vmax.f32 %v1027, 0.0
      %v1052 = vmax.f32 %v1028, 0.0
      %v1053 = vmax.f32 %v1029, 0.0
      %v1054 = vmax.f32 %v1030, 0.0
      %v1055 = vmax.f32 %v1031, 0.0
      %v1056 = vmax.f32 %v1032, 0.0
      %v1057 = vmax.f32 %v1033, 0.0
      %v1058 = vmax.f32 %v1034, 0.0
      %v1059 = vmax.f32 %v1035, 0.0
      %v1060 = vmax.f32 %v1036, 0.0
      %v1061 = vmax.f32 %v1037, 0.0
      %v1062 = vmax.f32 %v1038, 0.0
      %v1063 = vmax.f32 %v1039, 0.0
      %v1064 = vpack.c.bf16 %v1041, %v1040
      %v1065 = vpack.c.bf16 %v1043, %v1042
      %v1066 = vpack.c.bf16 %v1045, %v1044
      %v1067 = vpack.c.bf16 %v1047, %v1046
      %v1068 = vpack.c.bf16 %v1049, %v1048
      %v1069 = vpack.c.bf16 %v1051, %v1050
      %v1070 = vpack.c.bf16 %v1053, %v1052
      %v1071 = vpack.c.bf16 %v1055, %v1054
      %v1072 = vpack.c.bf16 %v1057, %v1056
      %v1073 = vpack.c.bf16 %v1059, %v1058
      %v1074 = vpack.c.bf16 %v1061, %v1060
      %v1075 = vpack.c.bf16 %v1063, %v1062
      %v1076 = vld [vmem:[%s4] sm:$0xf]
      %v1077 = vld [vmem:[%s4 + $0x4] sm:$0xf]
      %v1078 = vld [vmem:[%s4 + $0x8] sm:$0xf]
      %v1079 = vld [vmem:[%s4 + $0xc] sm:$0xf]
      %v1084 = vunpack.c.l.b16 %v1076
      %v1085 = vunpack.c.l.b16 %v1077
      %v1086 = vunpack.c.l.b16 %v1078
      %v1087 = vunpack.c.l.b16 %v1079
      %v1088 = vpack.c.b16 %v1085, %v1084
      %v1089 = vpack.c.b16 %v1087, %v1086
      %vm1092 = vcmask 261120
      %v1094 = vsel %vm1092, %v1064, 0
      %v1097 = vsel %vm1092, %v1065, 0
      %v1100 = vsel %vm1092, %v1066, 0
      %v1103 = vsel %vm1092, %v1067, 0
      %v1106 = vsel %vm1092, %v1068, 0
      %v1109 = vsel %vm1092, %v1069, 0
      %v1112 = vsel %vm1092, %v1070, 0
      %v1115 = vsel %vm1092, %v1071, 0
      %v1118 = vsel %vm1092, %v1072, 0
      %v1121 = vsel %vm1092, %v1073, 0
      %v1124 = vsel %vm1092, %v1074, 0
      %v1127 = vsel %vm1092, %v1075, 0
      %1129 = vmatprep.subr.bf16.mxu0 0
      %1130 = vmatpush1.bf16.msra.mxu0 0
      %1131 = vmatprep.subr.bf16.mxu0 0
      %1132 = vmatpush1.bf16.msra.mxu0 0
      %1133 = vmatprep.subr.bf16.mxu0 0
      %1134 = vmatpush1.bf16.msra.mxu0 0
      %1135 = vmatprep.subr.bf16.mxu0 0
      %1136 = vmatpush1.bf16.msra.mxu0 0
      %1137 = vmatprep.subr.bf16.mxu0 0
      %1138 = vmatpush1.bf16.msra.mxu0 0
      %1139 = vmatprep.subr.bf16.mxu0 0
      %1140 = vmatpush1.bf16.msra.mxu0 0
      %1141 = vmatprep.subr.bf16.mxu0 0
      %1142 = vmatpush1.bf16.msra.mxu0 %v1089
      %1143 = vmatprep.subr.bf16.mxu0 0
      %1144 = vmatpush1.bf16.msra.mxu0 %v1088
      %1145 = vmatprep.subr.bf16.mxu0 0
      %1146 = vmatpush2.bf16.msra.mxu0 0
      %1147 = vmatprep.subr.bf16.mxu0 0
      %1148 = vmatpush2.bf16.msra.mxu0 0
      %1149 = vmatprep.subr.bf16.mxu0 0
      %1150 = vmatpush2.bf16.msra.mxu0 0
      %1151 = vmatprep.subr.bf16.mxu0 0
      %1152 = vmatpush2.bf16.msra.mxu0 0
      %1153 = vmatprep.subr.bf16.mxu0 0
      %1154 = vmatpush2.bf16.msra.mxu0 0
      %1155 = vmatprep.subr.bf16.mxu0 0
      %1156 = vmatpush2.bf16.msra.mxu0 0
      %1157 = vmatprep.subr.bf16.mxu0 0
      %1158 = vmatpush2.bf16.msra.mxu0 0
      %1159 = vmatprep.subr.bf16.mxu0 0
      %1160 = vmatpush2.bf16.msra.mxu0 0
      %1161 = vmatprep.mubr.bf16.mxu0 0
      %1162 = vmatmul.mubr.bf16.gmra.mxu0 %v1094
      %v1163 = vpop.f32.mrf.mxu0
      %v1164 = vadd.f32 0.0, %v1163
      %v1165 = vpop.f32.mrf.mxu0
      %v1166 = vpop.f32.mrf.mxu0
      %v1167 = vadd.f32 0.0, %v1166
      %v1168 = vpop.f32.mrf.mxu0
      %1169 = vmatprep.mubr.bf16.mxu0 0
      %1170 = vmatmul.mubr.bf16.gmra.mxu0 %v1097
      %v1171 = vpop.f32.mrf.mxu0
      %v1172 = vadd.f32 0.0, %v1171
      %v1173 = vpop.f32.mrf.mxu0
      %v1174 = vpop.f32.mrf.mxu0
      %v1175 = vadd.f32 0.0, %v1174
      %v1176 = vpop.f32.mrf.mxu0
      %1177 = vmatprep.mubr.bf16.mxu0 0
      %1178 = vmatmul.mubr.bf16.gmra.mxu0 %v1100
      %v1179 = vpop.f32.mrf.mxu0
      %v1180 = vadd.f32 0.0, %v1179
      %v1181 = vpop.f32.mrf.mxu0
      %v1182 = vpop.f32.mrf.mxu0
      %v1183 = vadd.f32 0.0, %v1182
      %v1184 = vpop.f32.mrf.mxu0
      %1185 = vmatprep.mubr.bf16.mxu0 0
      %1186 = vmatmul.mubr.bf16.gmra.mxu0 %v1103
      %v1187 = vpop.f32.mrf.mxu0
      %v1188 = vadd.f32 0.0, %v1187
      %v1189 = vpop.f32.mrf.mxu0
      %v1190 = vpop.f32.mrf.mxu0
      %v1191 = vadd.f32 0.0, %v1190
      %v1192 = vpop.f32.mrf.mxu0
      %1193 = vmatprep.mubr.bf16.mxu0 0
      %1194 = vmatmul.mubr.bf16.gmra.mxu0 %v1106
      %v1195 = vpop.f32.mrf.mxu0
      %v1196 = vadd.f32 0.0, %v1195
      %v1197 = vpop.f32.mrf.mxu0
      %v1198 = vpop.f32.mrf.mxu0
      %v1199 = vadd.f32 0.0, %v1198
      %v1200 = vpop.f32.mrf.mxu0
      %1201 = vmatprep.mubr.bf16.mxu0 0
      %1202 = vmatmul.mubr.bf16.gmra.mxu0 %v1109
      %v1203 = vpop.f32.mrf.mxu0
      %v1204 = vadd.f32 0.0, %v1203
      %v1205 = vpop.f32.mrf.mxu0
      %v1206 = vpop.f32.mrf.mxu0
      %v1207 = vadd.f32 0.0, %v1206
      %v1208 = vpop.f32.mrf.mxu0
      %1209 = vmatprep.mubr.bf16.mxu0 0
      %1210 = vmatmul.mubr.bf16.gmra.mxu0 %v1112
      %v1211 = vpop.f32.mrf.mxu0
      %v1212 = vadd.f32 0.0, %v1211
      %v1213 = vpop.f32.mrf.mxu0
      %v1214 = vpop.f32.mrf.mxu0
      %v1215 = vadd.f32 0.0, %v1214
      %v1216 = vpop.f32.mrf.mxu0
      %1217 = vmatprep.mubr.bf16.mxu0 0
      %1218 = vmatmul.mubr.bf16.gmra.mxu0 %v1115
      %v1219 = vpop.f32.mrf.mxu0
      %v1220 = vadd.f32 0.0, %v1219
      %v1221 = vpop.f32.mrf.mxu0
      %v1222 = vpop.f32.mrf.mxu0
      %v1223 = vadd.f32 0.0, %v1222
      %v1224 = vpop.f32.mrf.mxu0
      %1225 = vmatprep.mubr.bf16.mxu0 0
      %1226 = vmatmul.mubr.bf16.gmra.mxu0 %v1118
      %v1227 = vpop.f32.mrf.mxu0
      %v1228 = vadd.f32 0.0, %v1227
      %v1229 = vpop.f32.mrf.mxu0
      %v1230 = vpop.f32.mrf.mxu0
      %v1231 = vadd.f32 0.0, %v1230
      %v1232 = vpop.f32.mrf.mxu0
      %1233 = vmatprep.mubr.bf16.mxu0 0
      %1234 = vmatmul.mubr.bf16.gmra.mxu0 %v1121
      %v1235 = vpop.f32.mrf.mxu0
      %v1236 = vadd.f32 0.0, %v1235
      %v1237 = vpop.f32.mrf.mxu0
      %v1238 = vpop.f32.mrf.mxu0
      %v1239 = vadd.f32 0.0, %v1238
      %v1240 = vpop.f32.mrf.mxu0
      %1241 = vmatprep.mubr.bf16.mxu0 0
      %1242 = vmatmul.mubr.bf16.gmra.mxu0 %v1124
      %v1243 = vpop.f32.mrf.mxu0
      %v1244 = vadd.f32 0.0, %v1243
      %v1245 = vpop.f32.mrf.mxu0
      %v1246 = vpop.f32.mrf.mxu0
      %v1247 = vadd.f32 0.0, %v1246
      %v1248 = vpop.f32.mrf.mxu0
      %1249 = vmatprep.mubr.bf16.mxu0 0
      %1250 = vmatmul.mubr.bf16.gmra.mxu0 %v1127
      %v1251 = vpop.f32.mrf.mxu0
      %v1252 = vadd.f32 0.0, %v1251
      %v1253 = vpop.f32.mrf.mxu0
      %v1254 = vpop.f32.mrf.mxu0
      %v1255 = vadd.f32 0.0, %v1254
      %v1256 = vpop.f32.mrf.mxu0
      %1257 = vdwg.mxu0
      %v1258 = vpack.c.bf16 %v1167, %v1164
      %v1259 = vpack.c.bf16 %v1175, %v1172
      %v1260 = vpack.c.bf16 %v1183, %v1180
      %v1261 = vpack.c.bf16 %v1191, %v1188
      %v1262 = vpack.c.bf16 %v1199, %v1196
      %v1263 = vpack.c.bf16 %v1207, %v1204
      %v1264 = vpack.c.bf16 %v1215, %v1212
      %v1265 = vpack.c.bf16 %v1223, %v1220
      %v1266 = vpack.c.bf16 %v1231, %v1228
      %v1267 = vpack.c.bf16 %v1239, %v1236
      %v1268 = vpack.c.bf16 %v1247, %v1244
      %v1269 = vpack.c.bf16 %v1255, %v1252
      %v1270 = vld [vmem:[%s1] sm:$0xff]
      %v1271 = vld [vmem:[%s1 + $0x8] sm:$0xff]
      %v1272 = vld [vmem:[%s1 + $0x10] sm:$0xff]
      %v1273 = vld [vmem:[%s1 + $0x18] sm:$0xff]
      %v1274 = vld [vmem:[%s1 + $0x20] sm:$0xff]
      %v1275 = vld [vmem:[%s1 + $0x28] sm:$0xff]
      %v1276 = vld [vmem:[%s1 + $0x30] sm:$0xff]
      %v1277 = vld [vmem:[%s1 + $0x38] sm:$0xff]
      %v1278 = vld [vmem:[%s1 + $0x40] sm:$0xff]
      %v1279 = vld [vmem:[%s1 + $0x48] sm:$0xff]
      %v1280 = vld [vmem:[%s1 + $0x50] sm:$0xff]
      %v1281 = vld [vmem:[%s1 + $0x58] sm:$0xff]
      %v1282 = vld [vmem:[%s1 + $0x60] sm:$0xff]
      %v1283 = vld [vmem:[%s1 + $0x68] sm:$0xff]
      %v1284 = vld [vmem:[%s1 + $0x70] sm:$0xff]
      %v1285 = vld [vmem:[%s1 + $0x78] sm:$0xff]
      %v1286 = vld [vmem:[%s1 + $0x80] sm:$0xff]
      %v1287 = vld [vmem:[%s1 + $0x88] sm:$0xff]
      %v1288 = vld [vmem:[%s1 + $0x90] sm:$0xff]
      %v1289 = vld [vmem:[%s1 + $0x98] sm:$0xff]
      %v1290 = vld [vmem:[%s1 + $0xa0] sm:$0xff]
      %v1291 = vld [vmem:[%s1 + $0xa8] sm:$0xff]
      %v1292 = vld [vmem:[%s1 + $0xb0] sm:$0xff]
      %v1293 = vld [vmem:[%s1 + $0xb8] sm:$0xff]
      %v1318 = vunpack.c.l.b16 %v1270
      %v1319 = vunpack.c.h.b16 %v1270
      %v1320 = vunpack.c.l.b16 %v1271
      %v1321 = vunpack.c.h.b16 %v1271
      %v1322 = vunpack.c.l.b16 %v1272
      %v1323 = vunpack.c.h.b16 %v1272
      %v1324 = vunpack.c.l.b16 %v1273
      %v1325 = vunpack.c.h.b16 %v1273
      %v1326 = vunpack.c.l.b16 %v1274
      %v1327 = vunpack.c.h.b16 %v1274
      %v1328 = vunpack.c.l.b16 %v1275
      %v1329 = vunpack.c.h.b16 %v1275
      %v1330 = vunpack.c.l.b16 %v1276
      %v1331 = vunpack.c.h.b16 %v1276
      %v1332 = vunpack.c.l.b16 %v1277
      %v1333 = vunpack.c.h.b16 %v1277
      %v1334 = vunpack.c.l.b16 %v1278
      %v1335 = vunpack.c.h.b16 %v1278
      %v1336 = vunpack.c.l.b16 %v1279
      %v1337 = vunpack.c.h.b16 %v1279
      %v1338 = vunpack.c.l.b16 %v1280
      %v1339 = vunpack.c.h.b16 %v1280
      %v1340 = vunpack.c.l.b16 %v1281
      %v1341 = vunpack.c.h.b16 %v1281
      %v1342 = vunpack.c.l.b16 %v1282
      %v1343 = vunpack.c.h.b16 %v1282
      %v1344 = vunpack.c.l.b16 %v1283
      %v1345 = vunpack.c.h.b16 %v1283
      %v1346 = vunpack.c.l.b16 %v1284
      %v1347 = vunpack.c.h.b16 %v1284
      %v1348 = vunpack.c.l.b16 %v1285
      %v1349 = vunpack.c.h.b16 %v1285
      %v1350 = vunpack.c.l.b16 %v1286
      %v1351 = vunpack.c.h.b16 %v1286
      %v1352 = vunpack.c.l.b16 %v1287
      %v1353 = vunpack.c.h.b16 %v1287
      %v1354 = vunpack.c.l.b16 %v1288
      %v1355 = vunpack.c.h.b16 %v1288
      %v1356 = vunpack.c.l.b16 %v1289
      %v1357 = vunpack.c.h.b16 %v1289
      %v1358 = vunpack.c.l.b16 %v1290
      %v1359 = vunpack.c.h.b16 %v1290
      %v1360 = vunpack.c.l.b16 %v1291
      %v1361 = vunpack.c.h.b16 %v1291
      %v1362 = vunpack.c.l.b16 %v1292
      %v1363 = vunpack.c.h.b16 %v1292
      %v1364 = vunpack.c.l.b16 %v1293
      %v1365 = vunpack.c.h.b16 %v1293
      %v1366 = vpack.c.b16 %v1320, %v1318
      %v1367 = vpack.c.b16 %v1321, %v1319
      %v1368 = vpack.c.b16 %v1324, %v1322
      %v1369 = vpack.c.b16 %v1325, %v1323
      %v1370 = vpack.c.b16 %v1328, %v1326
      %v1371 = vpack.c.b16 %v1329, %v1327
      %v1372 = vpack.c.b16 %v1332, %v1330
      %v1373 = vpack.c.b16 %v1333, %v1331
      %v1374 = vpack.c.b16 %v1336, %v1334
      %v1375 = vpack.c.b16 %v1337, %v1335
      %v1376 = vpack.c.b16 %v1340, %v1338
      %v1377 = vpack.c.b16 %v1341, %v1339
      %v1378 = vpack.c.b16 %v1344, %v1342
      %v1379 = vpack.c.b16 %v1345, %v1343
      %v1380 = vpack.c.b16 %v1348, %v1346
      %v1381 = vpack.c.b16 %v1349, %v1347
      %v1382 = vpack.c.b16 %v1352, %v1350
      %v1383 = vpack.c.b16 %v1353, %v1351
      %v1384 = vpack.c.b16 %v1356, %v1354
      %v1385 = vpack.c.b16 %v1357, %v1355
      %v1386 = vpack.c.b16 %v1360, %v1358
      %v1387 = vpack.c.b16 %v1361, %v1359
      %v1388 = vpack.c.b16 %v1364, %v1362
      %v1389 = vpack.c.b16 %v1365, %v1363
      %1414 = vrot.lane.b32.xlu0 %v1258, 96
      %v1415 = vpop.permute.xlu0 %1414
      %1416 = vrot.lane.b32.xlu0 %v1259, 96
      %v1417 = vpop.permute.xlu0 %1416
      %1418 = vrot.lane.b32.xlu0 %v1260, 96
      %v1419 = vpop.permute.xlu0 %1418
      %1420 = vrot.lane.b32.xlu0 %v1261, 96
      %v1421 = vpop.permute.xlu0 %1420
      %1422 = vrot.lane.b32.xlu0 %v1262, 96
      %v1423 = vpop.permute.xlu0 %1422
      %1424 = vrot.lane.b32.xlu0 %v1263, 96
      %v1425 = vpop.permute.xlu0 %1424
      %1426 = vrot.lane.b32.xlu0 %v1264, 96
      %v1427 = vpop.permute.xlu0 %1426
      %1428 = vrot.lane.b32.xlu0 %v1265, 96
      %v1429 = vpop.permute.xlu0 %1428
      %1430 = vrot.lane.b32.xlu0 %v1266, 96
      %v1431 = vpop.permute.xlu0 %1430
      %1432 = vrot.lane.b32.xlu0 %v1267, 96
      %v1433 = vpop.permute.xlu0 %1432
      %1434 = vrot.lane.b32.xlu0 %v1268, 96
      %v1435 = vpop.permute.xlu0 %1434
      %1436 = vrot.lane.b32.xlu0 %v1269, 96
      %v1437 = vpop.permute.xlu0 %1436
      %vm1450 = vcmask 523264
      %v1452 = vsel %vm1450, %v1367, 0
      %v1455 = vsel %vm1450, %v1369, 0
      %v1458 = vsel %vm1450, %v1371, 0
      %v1461 = vsel %vm1450, %v1373, 0
      %v1464 = vsel %vm1450, %v1375, 0
      %v1467 = vsel %vm1450, %v1377, 0
      %v1470 = vsel %vm1450, %v1379, 0
      %v1473 = vsel %vm1450, %v1381, 0
      %v1476 = vsel %vm1450, %v1383, 0
      %v1479 = vsel %vm1450, %v1385, 0
      %v1482 = vsel %vm1450, %v1387, 0
      %v1485 = vsel %vm1450, %v1389, 0
      %1487 = vmatprep.subr.bf16.mxu0 0
      %1488 = vmatpush1.bf16.msra.mxu0 %v1429
      %1489 = vmatprep.subr.bf16.mxu0 0
      %1490 = vmatpush1.bf16.msra.mxu0 %v1427
      %1491 = vmatprep.subr.bf16.mxu0 0
      %1492 = vmatpush1.bf16.msra.mxu0 %v1425
      %1493 = vmatprep.subr.bf16.mxu0 0
      %1494 = vmatpush1.bf16.msra.mxu0 %v1423
      %1495 = vmatprep.subr.bf16.mxu0 0
      %1496 = vmatpush1.bf16.msra.mxu0 %v1421
      %1497 = vmatprep.subr.bf16.mxu0 0
      %1498 = vmatpush1.bf16.msra.mxu0 %v1419
      %1499 = vmatprep.subr.bf16.mxu0 0
      %1500 = vmatpush1.bf16.msra.mxu0 %v1417
      %1501 = vmatprep.subr.bf16.mxu0 0
      %1502 = vmatpush1.bf16.msra.mxu0 %v1415
      %1503 = vmatprep.subr.bf16.mxu0 0
      %1504 = vmatpush2.bf16.msra.mxu0 0
      %1505 = vmatprep.subr.bf16.mxu0 0
      %1506 = vmatpush2.bf16.msra.mxu0 0
      %1507 = vmatprep.subr.bf16.mxu0 0
      %1508 = vmatpush2.bf16.msra.mxu0 0
      %1509 = vmatprep.subr.bf16.mxu0 0
      %1510 = vmatpush2.bf16.msra.mxu0 0
      %1511 = vmatprep.subr.bf16.mxu0 0
      %1512 = vmatpush2.bf16.msra.mxu0 %v1437
      %1513 = vmatprep.subr.bf16.mxu0 0
      %1514 = vmatpush2.bf16.msra.mxu0 %v1435
      %1515 = vmatprep.subr.bf16.mxu0 0
      %1516 = vmatpush2.bf16.msra.mxu0 %v1433
      %1517 = vmatprep.subr.bf16.mxu0 0
      %1518 = vmatpush2.bf16.msra.mxu0 %v1431
      %1519 = vmatprep.mubr.bf16.mxu0 %v1452
      %1520 = vmatmul.mubr.bf16.gmra.mxu0 %v1366
      %v1521 = vpop.f32.mrf.mxu0
      %v1522 = vadd.f32 0.0, %v1521
      %v1523 = vpop.f32.mrf.mxu0
      %v1524 = vpop.f32.mrf.mxu0
      %v1525 = vadd.f32 0.0, %v1524
      %v1526 = vpop.f32.mrf.mxu0
      %1527 = vmatprep.mubr.bf16.mxu0 %v1455
      %1528 = vmatmul.mubr.bf16.gmra.mxu0 %v1368
      %v1529 = vpop.f32.mrf.mxu0
      %v1530 = vadd.f32 0.0, %v1529
      %v1531 = vpop.f32.mrf.mxu0
      %v1532 = vpop.f32.mrf.mxu0
      %v1533 = vadd.f32 0.0, %v1532
      %v1534 = vpop.f32.mrf.mxu0
      %1535 = vmatprep.mubr.bf16.mxu0 %v1458
      %1536 = vmatmul.mubr.bf16.gmra.mxu0 %v1370
      %v1537 = vpop.f32.mrf.mxu0
      %v1538 = vadd.f32 0.0, %v1537
      %v1539 = vpop.f32.mrf.mxu0
      %v1540 = vpop.f32.mrf.mxu0
      %v1541 = vadd.f32 0.0, %v1540
      %v1542 = vpop.f32.mrf.mxu0
      %1543 = vmatprep.mubr.bf16.mxu0 %v1461
      %1544 = vmatmul.mubr.bf16.gmra.mxu0 %v1372
      %v1545 = vpop.f32.mrf.mxu0
      %v1546 = vadd.f32 0.0, %v1545
      %v1547 = vpop.f32.mrf.mxu0
      %v1548 = vpop.f32.mrf.mxu0
      %v1549 = vadd.f32 0.0, %v1548
      %v1550 = vpop.f32.mrf.mxu0
      %1551 = vmatprep.mubr.bf16.mxu0 %v1464
      %1552 = vmatmul.mubr.bf16.gmra.mxu0 %v1374
      %v1553 = vpop.f32.mrf.mxu0
      %v1554 = vadd.f32 0.0, %v1553
      %v1555 = vpop.f32.mrf.mxu0
      %v1556 = vpop.f32.mrf.mxu0
      %v1557 = vadd.f32 0.0, %v1556
      %v1558 = vpop.f32.mrf.mxu0
      %1559 = vmatprep.mubr.bf16.mxu0 %v1467
      %1560 = vmatmul.mubr.bf16.gmra.mxu0 %v1376
      %v1561 = vpop.f32.mrf.mxu0
      %v1562 = vadd.f32 0.0, %v1561
      %v1563 = vpop.f32.mrf.mxu0
      %v1564 = vpop.f32.mrf.mxu0
      %v1565 = vadd.f32 0.0, %v1564
      %v1566 = vpop.f32.mrf.mxu0
      %1567 = vmatprep.mubr.bf16.mxu0 %v1470
      %1568 = vmatmul.mubr.bf16.gmra.mxu0 %v1378
      %v1569 = vpop.f32.mrf.mxu0
      %v1570 = vadd.f32 0.0, %v1569
      %v1571 = vpop.f32.mrf.mxu0
      %v1572 = vpop.f32.mrf.mxu0
      %v1573 = vadd.f32 0.0, %v1572
      %v1574 = vpop.f32.mrf.mxu0
      %1575 = vmatprep.mubr.bf16.mxu0 %v1473
      %1576 = vmatmul.mubr.bf16.gmra.mxu0 %v1380
      %v1577 = vpop.f32.mrf.mxu0
      %v1578 = vadd.f32 0.0, %v1577
      %v1579 = vpop.f32.mrf.mxu0
      %v1580 = vpop.f32.mrf.mxu0
      %v1581 = vadd.f32 0.0, %v1580
      %v1582 = vpop.f32.mrf.mxu0
      %1583 = vmatprep.mubr.bf16.mxu0 %v1476
      %1584 = vmatmul.mubr.bf16.gmra.mxu0 %v1382
      %v1585 = vpop.f32.mrf.mxu0
      %v1586 = vadd.f32 0.0, %v1585
      %v1587 = vpop.f32.mrf.mxu0
      %v1588 = vpop.f32.mrf.mxu0
      %v1589 = vadd.f32 0.0, %v1588
      %v1590 = vpop.f32.mrf.mxu0
      %1591 = vmatprep.mubr.bf16.mxu0 %v1479
      %1592 = vmatmul.mubr.bf16.gmra.mxu0 %v1384
      %v1593 = vpop.f32.mrf.mxu0
      %v1594 = vadd.f32 0.0, %v1593
      %v1595 = vpop.f32.mrf.mxu0
      %v1596 = vpop.f32.mrf.mxu0
      %v1597 = vadd.f32 0.0, %v1596
      %v1598 = vpop.f32.mrf.mxu0
      %1599 = vmatprep.mubr.bf16.mxu0 %v1482
      %1600 = vmatmul.mubr.bf16.gmra.mxu0 %v1386
      %v1601 = vpop.f32.mrf.mxu0
      %v1602 = vadd.f32 0.0, %v1601
      %v1603 = vpop.f32.mrf.mxu0
      %v1604 = vpop.f32.mrf.mxu0
      %v1605 = vadd.f32 0.0, %v1604
      %v1606 = vpop.f32.mrf.mxu0
      %1607 = vmatprep.mubr.bf16.mxu0 %v1485
      %1608 = vmatmul.mubr.bf16.gmra.mxu0 %v1388
      %v1609 = vpop.f32.mrf.mxu0
      %v1610 = vadd.f32 0.0, %v1609
      %v1611 = vpop.f32.mrf.mxu0
      %v1612 = vpop.f32.mrf.mxu0
      %v1613 = vadd.f32 0.0, %v1612
      %v1614 = vpop.f32.mrf.mxu0
      %1615 = vdwg.mxu0
      %v1616 = vadd.f32 %v1164, %v1522
      %v1617 = vadd.f32 %v1167, %v1525
      %v1618 = vadd.f32 %v1172, %v1530
      %v1619 = vadd.f32 %v1175, %v1533
      %v1620 = vadd.f32 %v1180, %v1538
      %v1621 = vadd.f32 %v1183, %v1541
      %v1622 = vadd.f32 %v1188, %v1546
      %v1623 = vadd.f32 %v1191, %v1549
      %v1624 = vadd.f32 %v1196, %v1554
      %v1625 = vadd.f32 %v1199, %v1557
      %v1626 = vadd.f32 %v1204, %v1562
      %v1627 = vadd.f32 %v1207, %v1565
      %v1628 = vadd.f32 %v1212, %v1570
      %v1629 = vadd.f32 %v1215, %v1573
      %v1630 = vadd.f32 %v1220, %v1578
      %v1631 = vadd.f32 %v1223, %v1581
      %v1632 = vadd.f32 %v1228, %v1586
      %v1633 = vadd.f32 %v1231, %v1589
      %v1634 = vadd.f32 %v1236, %v1594
      %v1635 = vadd.f32 %v1239, %v1597
      %v1636 = vadd.f32 %v1244, %v1602
      %v1637 = vadd.f32 %v1247, %v1605
      %v1638 = vadd.f32 %v1252, %v1610
      %v1639 = vadd.f32 %v1255, %v1613
      %v1640 = vld [vmem:[%s5] sm:$0x1]
      %v1642 = vlaneseq
      %v1643 = vshrl.u32 %v1642, 7
      %v1644 = vsub.s32 0, %v1643
      %v1645 = vrot.slane %v1640, %v1644
      %v1647 = vadd.f32 %v1616, %v1645
      %v1648 = vadd.f32 %v1617, %v1645
      %v1649 = vadd.f32 %v1618, %v1645
      %v1650 = vadd.f32 %v1619, %v1645
      %v1651 = vadd.f32 %v1620, %v1645
      %v1652 = vadd.f32 %v1621, %v1645
      %v1653 = vadd.f32 %v1622, %v1645
      %v1654 = vadd.f32 %v1623, %v1645
      %v1655 = vadd.f32 %v1624, %v1645
      %v1656 = vadd.f32 %v1625, %v1645
      %v1657 = vadd.f32 %v1626, %v1645
      %v1658 = vadd.f32 %v1627, %v1645
      %v1659 = vadd.f32 %v1628, %v1645
      %v1660 = vadd.f32 %v1629, %v1645
      %v1661 = vadd.f32 %v1630, %v1645
      %v1662 = vadd.f32 %v1631, %v1645
      %v1663 = vadd.f32 %v1632, %v1645
      %v1664 = vadd.f32 %v1633, %v1645
      %v1665 = vadd.f32 %v1634, %v1645
      %v1666 = vadd.f32 %v1635, %v1645
      %v1667 = vadd.f32 %v1636, %v1645
      %v1668 = vadd.f32 %v1637, %v1645
      %v1669 = vadd.f32 %v1638, %v1645
      %v1670 = vadd.f32 %v1639, %v1645
      %v1671 = vmax.f32 %v1647, 0.0
      %v1672 = vmax.f32 %v1648, 0.0
      %v1673 = vmax.f32 %v1649, 0.0
      %v1674 = vmax.f32 %v1650, 0.0
      %v1675 = vmax.f32 %v1651, 0.0
      %v1676 = vmax.f32 %v1652, 0.0
      %v1677 = vmax.f32 %v1653, 0.0
      %v1678 = vmax.f32 %v1654, 0.0
      %v1679 = vmax.f32 %v1655, 0.0
      %v1680 = vmax.f32 %v1656, 0.0
      %v1681 = vmax.f32 %v1657, 0.0
      %v1682 = vmax.f32 %v1658, 0.0
      %v1683 = vmax.f32 %v1659, 0.0
      %v1684 = vmax.f32 %v1660, 0.0
      %v1685 = vmax.f32 %v1661, 0.0
      %v1686 = vmax.f32 %v1662, 0.0
      %v1687 = vmax.f32 %v1663, 0.0
      %v1688 = vmax.f32 %v1664, 0.0
      %v1689 = vmax.f32 %v1665, 0.0
      %v1690 = vmax.f32 %v1666, 0.0
      %v1691 = vmax.f32 %v1667, 0.0
      %v1692 = vmax.f32 %v1668, 0.0
      %v1693 = vmax.f32 %v1669, 0.0
      %v1694 = vmax.f32 %v1670, 0.0
      %v1695 = vpack.c.bf16 %v1672, %v1671
      %v1696 = vpack.c.bf16 %v1674, %v1673
      %v1697 = vpack.c.bf16 %v1676, %v1675
      %v1698 = vpack.c.bf16 %v1678, %v1677
      %v1699 = vpack.c.bf16 %v1680, %v1679
      %v1700 = vpack.c.bf16 %v1682, %v1681
      %v1701 = vpack.c.bf16 %v1684, %v1683
      %v1702 = vpack.c.bf16 %v1686, %v1685
      %v1703 = vpack.c.bf16 %v1688, %v1687
      %v1704 = vpack.c.bf16 %v1690, %v1689
      %v1705 = vpack.c.bf16 %v1692, %v1691
      %v1706 = vpack.c.bf16 %v1694, %v1693
      %v1707 = vld [vmem:[%s6] sm:$0xf]
      %v1708 = vld [vmem:[%s6 + $0x4] sm:$0xf]
      %v1709 = vld [vmem:[%s6 + $0x8] sm:$0xf]
      %v1710 = vld [vmem:[%s6 + $0xc] sm:$0xf]
      %s1711 = scalar_lea.vmem %s6, 16
      %v1712 = vld [vmem:[%s1711] sm:$0xf]
      %v1713 = vld [vmem:[%s1711 + $0x4] sm:$0xf]
      %v1714 = vld [vmem:[%s1711 + $0x8] sm:$0xf]
      %v1715 = vld [vmem:[%s1711 + $0xc] sm:$0xf]
      %v1720 = vunpack.c.l.b16 %v1712
      %v1721 = vunpack.c.l.b16 %v1713
      %v1722 = vunpack.c.l.b16 %v1714
      %v1723 = vunpack.c.l.b16 %v1715
      %v1724 = vpack.c.b16 %v1721, %v1720
      %v1725 = vpack.c.b16 %v1723, %v1722
      %v1729 = vsel %vm1092, %v1696, 0
      %v1732 = vsel %vm1092, %v1697, 0
      %v1735 = vsel %vm1092, %v1698, 0
      %v1738 = vsel %vm1092, %v1699, 0
      %v1741 = vsel %vm1092, %v1700, 0
      %v1744 = vsel %vm1092, %v1701, 0
      %v1747 = vsel %vm1092, %v1702, 0
      %v1750 = vsel %vm1092, %v1703, 0
      %v1753 = vsel %vm1092, %v1704, 0
      %v1756 = vsel %vm1092, %v1705, 0
      %1758 = vmatprep.subr.bf16.mxu0 0
      %1759 = vmatpush1.bf16.msra.mxu0 0
      %1760 = vmatprep.subr.bf16.mxu0 0
      %1761 = vmatpush1.bf16.msra.mxu0 0
      %1762 = vmatprep.subr.bf16.mxu0 0
      %1763 = vmatpush1.bf16.msra.mxu0 0
      %1764 = vmatprep.subr.bf16.mxu0 0
      %1765 = vmatpush1.bf16.msra.mxu0 0
      %1766 = vmatprep.subr.bf16.mxu0 0
      %1767 = vmatpush1.bf16.msra.mxu0 0
      %1768 = vmatprep.subr.bf16.mxu0 0
      %1769 = vmatpush1.bf16.msra.mxu0 0
      %1770 = vmatprep.subr.bf16.mxu0 0
      %1771 = vmatpush1.bf16.msra.mxu0 %v1725
      %1772 = vmatprep.subr.bf16.mxu0 0
      %1773 = vmatpush1.bf16.msra.mxu0 %v1724
      %1774 = vmatprep.subr.bf16.mxu0 0
      %1775 = vmatpush2.bf16.msra.mxu0 0
      %1776 = vmatprep.subr.bf16.mxu0 0
      %1777 = vmatpush2.bf16.msra.mxu0 0
      %1778 = vmatprep.subr.bf16.mxu0 0
      %1779 = vmatpush2.bf16.msra.mxu0 0
      %1780 = vmatprep.subr.bf16.mxu0 0
      %1781 = vmatpush2.bf16.msra.mxu0 0
      %1782 = vmatprep.subr.bf16.mxu0 0
      %1783 = vmatpush2.bf16.msra.mxu0 0
      %1784 = vmatprep.subr.bf16.mxu0 0
      %1785 = vmatpush2.bf16.msra.mxu0 0
      %1786 = vmatprep.subr.bf16.mxu0 0
      %1787 = vmatpush2.bf16.msra.mxu0 0
      %1788 = vmatprep.subr.bf16.mxu0 0
      %1789 = vmatpush2.bf16.msra.mxu0 0
      %1790 = vmatprep.mubr.bf16.mxu0 0
      %1791 = vmatmul.mubr.bf16.gmra.mxu0 %v1729
      %v1792 = vpop.f32.mrf.mxu0
      %v1793 = vadd.f32 0.0, %v1792
      %v1794 = vpop.f32.mrf.mxu0
      %v1795 = vpop.f32.mrf.mxu0
      %v1796 = vadd.f32 0.0, %v1795
      %v1797 = vpop.f32.mrf.mxu0
      %1798 = vmatprep.mubr.bf16.mxu0 0
      %1799 = vmatmul.mubr.bf16.gmra.mxu0 %v1732
      %v1800 = vpop.f32.mrf.mxu0
      %v1801 = vadd.f32 0.0, %v1800
      %v1802 = vpop.f32.mrf.mxu0
      %v1803 = vpop.f32.mrf.mxu0
      %v1804 = vadd.f32 0.0, %v1803
      %v1805 = vpop.f32.mrf.mxu0
      %1806 = vmatprep.mubr.bf16.mxu0 0
      %1807 = vmatmul.mubr.bf16.gmra.mxu0 %v1735
      %v1808 = vpop.f32.mrf.mxu0
      %v1809 = vadd.f32 0.0, %v1808
      %v1810 = vpop.f32.mrf.mxu0
      %v1811 = vpop.f32.mrf.mxu0
      %v1812 = vadd.f32 0.0, %v1811
      %v1813 = vpop.f32.mrf.mxu0
      %1814 = vmatprep.mubr.bf16.mxu0 0
      %1815 = vmatmul.mubr.bf16.gmra.mxu0 %v1738
      %v1816 = vpop.f32.mrf.mxu0
      %v1817 = vadd.f32 0.0, %v1816
      %v1818 = vpop.f32.mrf.mxu0
      %v1819 = vpop.f32.mrf.mxu0
      %v1820 = vadd.f32 0.0, %v1819
      %v1821 = vpop.f32.mrf.mxu0
      %1822 = vmatprep.mubr.bf16.mxu0 0
      %1823 = vmatmul.mubr.bf16.gmra.mxu0 %v1741
      %v1824 = vpop.f32.mrf.mxu0
      %v1825 = vadd.f32 0.0, %v1824
      %v1826 = vpop.f32.mrf.mxu0
      %v1827 = vpop.f32.mrf.mxu0
      %v1828 = vadd.f32 0.0, %v1827
      %v1829 = vpop.f32.mrf.mxu0
      %1830 = vmatprep.mubr.bf16.mxu0 0
      %1831 = vmatmul.mubr.bf16.gmra.mxu0 %v1744
      %v1832 = vpop.f32.mrf.mxu0
      %v1833 = vadd.f32 0.0, %v1832
      %v1834 = vpop.f32.mrf.mxu0
      %v1835 = vpop.f32.mrf.mxu0
      %v1836 = vadd.f32 0.0, %v1835
      %v1837 = vpop.f32.mrf.mxu0
      %1838 = vmatprep.mubr.bf16.mxu0 0
      %1839 = vmatmul.mubr.bf16.gmra.mxu0 %v1747
      %v1840 = vpop.f32.mrf.mxu0
      %v1841 = vadd.f32 0.0, %v1840
      %v1842 = vpop.f32.mrf.mxu0
      %v1843 = vpop.f32.mrf.mxu0
      %v1844 = vadd.f32 0.0, %v1843
      %v1845 = vpop.f32.mrf.mxu0
      %1846 = vmatprep.mubr.bf16.mxu0 0
      %1847 = vmatmul.mubr.bf16.gmra.mxu0 %v1750
      %v1848 = vpop.f32.mrf.mxu0
      %v1849 = vadd.f32 0.0, %v1848
      %v1850 = vpop.f32.mrf.mxu0
      %v1851 = vpop.f32.mrf.mxu0
      %v1852 = vadd.f32 0.0, %v1851
      %v1853 = vpop.f32.mrf.mxu0
      %1854 = vmatprep.mubr.bf16.mxu0 0
      %1855 = vmatmul.mubr.bf16.gmra.mxu0 %v1753
      %v1856 = vpop.f32.mrf.mxu0
      %v1857 = vadd.f32 0.0, %v1856
      %v1858 = vpop.f32.mrf.mxu0
      %v1859 = vpop.f32.mrf.mxu0
      %v1860 = vadd.f32 0.0, %v1859
      %v1861 = vpop.f32.mrf.mxu0
      %1862 = vmatprep.mubr.bf16.mxu0 0
      %1863 = vmatmul.mubr.bf16.gmra.mxu0 %v1756
      %v1864 = vpop.f32.mrf.mxu0
      %v1865 = vadd.f32 0.0, %v1864
      %v1866 = vpop.f32.mrf.mxu0
      %v1867 = vpop.f32.mrf.mxu0
      %v1868 = vadd.f32 0.0, %v1867
      %v1869 = vpop.f32.mrf.mxu0
      %1870 = vdwg.mxu0
      %v1875 = vunpack.c.l.b16 %v1707
      %v1876 = vunpack.c.l.b16 %v1708
      %v1877 = vunpack.c.l.b16 %v1709
      %v1878 = vunpack.c.l.b16 %v1710
      %v1879 = vpack.c.b16 %v1876, %v1875
      %v1880 = vpack.c.b16 %v1878, %v1877
      %v1884 = vsel %vm1092, %v1695, 0
      %1886 = vmatprep.subr.bf16.mxu0 0
      %1887 = vmatpush1.bf16.msra.mxu0 0
      %1888 = vmatprep.subr.bf16.mxu0 0
      %1889 = vmatpush1.bf16.msra.mxu0 0
      %1890 = vmatprep.subr.bf16.mxu0 0
      %1891 = vmatpush1.bf16.msra.mxu0 0
      %1892 = vmatprep.subr.bf16.mxu0 0
      %1893 = vmatpush1.bf16.msra.mxu0 0
      %1894 = vmatprep.subr.bf16.mxu0 0
      %1895 = vmatpush1.bf16.msra.mxu0 0
      %1896 = vmatprep.subr.bf16.mxu0 0
      %1897 = vmatpush1.bf16.msra.mxu0 0
      %1898 = vmatprep.subr.bf16.mxu0 0
      %1899 = vmatpush1.bf16.msra.mxu0 %v1880
      %1900 = vmatprep.subr.bf16.mxu0 0
      %1901 = vmatpush1.bf16.msra.mxu0 %v1879
      %1902 = vmatprep.subr.bf16.mxu0 0
      %1903 = vmatpush2.bf16.msra.mxu0 0
      %1904 = vmatprep.subr.bf16.mxu0 0
      %1905 = vmatpush2.bf16.msra.mxu0 0
      %1906 = vmatprep.subr.bf16.mxu0 0
      %1907 = vmatpush2.bf16.msra.mxu0 0
      %1908 = vmatprep.subr.bf16.mxu0 0
      %1909 = vmatpush2.bf16.msra.mxu0 0
      %1910 = vmatprep.subr.bf16.mxu0 0
      %1911 = vmatpush2.bf16.msra.mxu0 0
      %1912 = vmatprep.subr.bf16.mxu0 0
      %1913 = vmatpush2.bf16.msra.mxu0 0
      %1914 = vmatprep.subr.bf16.mxu0 0
      %1915 = vmatpush2.bf16.msra.mxu0 0
      %1916 = vmatprep.subr.bf16.mxu0 0
      %1917 = vmatpush2.bf16.msra.mxu0 0
      %1918 = vmatprep.mubr.bf16.mxu0 0
      %1919 = vmatmul.mubr.bf16.gmra.mxu0 %v1884
      %v1920 = vpop.f32.mrf.mxu0
      %v1921 = vadd.f32 %v1793, %v1920
      %v1922 = vpop.f32.mrf.mxu0
      %v1923 = vpop.f32.mrf.mxu0
      %v1924 = vadd.f32 %v1796, %v1923
      %v1925 = vpop.f32.mrf.mxu0
      %1926 = vmatprep.mubr.bf16.mxu0 0
      %1927 = vmatmul.mubr.bf16.gmra.mxu0 %v1729
      %v1928 = vpop.f32.mrf.mxu0
      %v1929 = vadd.f32 %v1801, %v1928
      %v1930 = vpop.f32.mrf.mxu0
      %v1931 = vpop.f32.mrf.mxu0
      %v1932 = vadd.f32 %v1804, %v1931
      %v1933 = vpop.f32.mrf.mxu0
      %1934 = vmatprep.mubr.bf16.mxu0 0
      %1935 = vmatmul.mubr.bf16.gmra.mxu0 %v1732
      %v1936 = vpop.f32.mrf.mxu0
      %v1937 = vadd.f32 %v1809, %v1936
      %v1938 = vpop.f32.mrf.mxu0
      %v1939 = vpop.f32.mrf.mxu0
      %v1940 = vadd.f32 %v1812, %v1939
      %v1941 = vpop.f32.mrf.mxu0
      %1942 = vmatprep.mubr.bf16.mxu0 0
      %1943 = vmatmul.mubr.bf16.gmra.mxu0 %v1735
      %v1944 = vpop.f32.mrf.mxu0
      %v1945 = vadd.f32 %v1817, %v1944
      %v1946 = vpop.f32.mrf.mxu0
      %v1947 = vpop.f32.mrf.mxu0
      %v1948 = vadd.f32 %v1820, %v1947
      %v1949 = vpop.f32.mrf.mxu0
      %1950 = vmatprep.mubr.bf16.mxu0 0
      %1951 = vmatmul.mubr.bf16.gmra.mxu0 %v1738
      %v1952 = vpop.f32.mrf.mxu0
      %v1953 = vadd.f32 %v1825, %v1952
      %v1954 = vpop.f32.mrf.mxu0
      %v1955 = vpop.f32.mrf.mxu0
      %v1956 = vadd.f32 %v1828, %v1955
      %v1957 = vpop.f32.mrf.mxu0
      %1958 = vmatprep.mubr.bf16.mxu0 0
      %1959 = vmatmul.mubr.bf16.gmra.mxu0 %v1741
      %v1960 = vpop.f32.mrf.mxu0
      %v1961 = vadd.f32 %v1833, %v1960
      %v1962 = vpop.f32.mrf.mxu0
      %v1963 = vpop.f32.mrf.mxu0
      %v1964 = vadd.f32 %v1836, %v1963
      %v1965 = vpop.f32.mrf.mxu0
      %1966 = vmatprep.mubr.bf16.mxu0 0
      %1967 = vmatmul.mubr.bf16.gmra.mxu0 %v1744
      %v1968 = vpop.f32.mrf.mxu0
      %v1969 = vadd.f32 %v1841, %v1968
      %v1970 = vpop.f32.mrf.mxu0
      %v1971 = vpop.f32.mrf.mxu0
      %v1972 = vadd.f32 %v1844, %v1971
      %v1973 = vpop.f32.mrf.mxu0
      %1974 = vmatprep.mubr.bf16.mxu0 0
      %1975 = vmatmul.mubr.bf16.gmra.mxu0 %v1747
      %v1976 = vpop.f32.mrf.mxu0
      %v1977 = vadd.f32 %v1849, %v1976
      %v1978 = vpop.f32.mrf.mxu0
      %v1979 = vpop.f32.mrf.mxu0
      %v1980 = vadd.f32 %v1852, %v1979
      %v1981 = vpop.f32.mrf.mxu0
      %1982 = vmatprep.mubr.bf16.mxu0 0
      %1983 = vmatmul.mubr.bf16.gmra.mxu0 %v1750
      %v1984 = vpop.f32.mrf.mxu0
      %v1985 = vadd.f32 %v1857, %v1984
      %v1986 = vpop.f32.mrf.mxu0
      %v1987 = vpop.f32.mrf.mxu0
      %v1988 = vadd.f32 %v1860, %v1987
      %v1989 = vpop.f32.mrf.mxu0
      %1990 = vmatprep.mubr.bf16.mxu0 0
      %1991 = vmatmul.mubr.bf16.gmra.mxu0 %v1753
      %v1992 = vpop.f32.mrf.mxu0
      %v1993 = vadd.f32 %v1865, %v1992
      %v1994 = vpop.f32.mrf.mxu0
      %v1995 = vpop.f32.mrf.mxu0
      %v1996 = vadd.f32 %v1868, %v1995
      %v1997 = vpop.f32.mrf.mxu0
      %1998 = vdwg.mxu0
      %s1999 = scalar_lea.vmem %s6, 32
      %v2000 = vld [vmem:[%s1999] sm:$0xf]
      %v2001 = vld [vmem:[%s1999 + $0x4] sm:$0xf]
      %v2002 = vld [vmem:[%s1999 + $0x8] sm:$0xf]
      %v2003 = vld [vmem:[%s1999 + $0xc] sm:$0xf]
      %v2008 = vunpack.c.l.b16 %v2000
      %v2009 = vunpack.c.l.b16 %v2001
      %v2010 = vunpack.c.l.b16 %v2002
      %v2011 = vunpack.c.l.b16 %v2003
      %v2012 = vpack.c.b16 %v2009, %v2008
      %v2013 = vpack.c.b16 %v2011, %v2010
      %v2017 = vsel %vm1092, %v1706, 0
      %2019 = vmatprep.subr.bf16.mxu0 0
      %2020 = vmatpush1.bf16.msra.mxu0 0
      %2021 = vmatprep.subr.bf16.mxu0 0
      %2022 = vmatpush1.bf16.msra.mxu0 0
      %2023 = vmatprep.subr.bf16.mxu0 0
      %2024 = vmatpush1.bf16.msra.mxu0 0
      %2025 = vmatprep.subr.bf16.mxu0 0
      %2026 = vmatpush1.bf16.msra.mxu0 0
      %2027 = vmatprep.subr.bf16.mxu0 0
      %2028 = vmatpush1.bf16.msra.mxu0 0
      %2029 = vmatprep.subr.bf16.mxu0 0
      %2030 = vmatpush1.bf16.msra.mxu0 0
      %2031 = vmatprep.subr.bf16.mxu0 0
      %2032 = vmatpush1.bf16.msra.mxu0 %v2013
      %2033 = vmatprep.subr.bf16.mxu0 0
      %2034 = vmatpush1.bf16.msra.mxu0 %v2012
      %2035 = vmatprep.subr.bf16.mxu0 0
      %2036 = vmatpush2.bf16.msra.mxu0 0
      %2037 = vmatprep.subr.bf16.mxu0 0
      %2038 = vmatpush2.bf16.msra.mxu0 0
      %2039 = vmatprep.subr.bf16.mxu0 0
      %2040 = vmatpush2.bf16.msra.mxu0 0
      %2041 = vmatprep.subr.bf16.mxu0 0
      %2042 = vmatpush2.bf16.msra.mxu0 0
      %2043 = vmatprep.subr.bf16.mxu0 0
      %2044 = vmatpush2.bf16.msra.mxu0 0
      %2045 = vmatprep.subr.bf16.mxu0 0
      %2046 = vmatpush2.bf16.msra.mxu0 0
      %2047 = vmatprep.subr.bf16.mxu0 0
      %2048 = vmatpush2.bf16.msra.mxu0 0
      %2049 = vmatprep.subr.bf16.mxu0 0
      %2050 = vmatpush2.bf16.msra.mxu0 0
      %2051 = vmatprep.mubr.bf16.mxu0 0
      %2052 = vmatmul.mubr.bf16.gmra.mxu0 %v1732
      %v2053 = vpop.f32.mrf.mxu0
      %v2054 = vadd.f32 0.0, %v2053
      %v2055 = vpop.f32.mrf.mxu0
      %v2056 = vpop.f32.mrf.mxu0
      %v2057 = vadd.f32 0.0, %v2056
      %v2058 = vpop.f32.mrf.mxu0
      %2059 = vmatprep.mubr.bf16.mxu0 0
      %2060 = vmatmul.mubr.bf16.gmra.mxu0 %v1735
      %v2061 = vpop.f32.mrf.mxu0
      %v2062 = vadd.f32 0.0, %v2061
      %v2063 = vpop.f32.mrf.mxu0
      %v2064 = vpop.f32.mrf.mxu0
      %v2065 = vadd.f32 0.0, %v2064
      %v2066 = vpop.f32.mrf.mxu0
      %2067 = vmatprep.mubr.bf16.mxu0 0
      %2068 = vmatmul.mubr.bf16.gmra.mxu0 %v1738
      %v2069 = vpop.f32.mrf.mxu0
      %v2070 = vadd.f32 0.0, %v2069
      %v2071 = vpop.f32.mrf.mxu0
      %v2072 = vpop.f32.mrf.mxu0
      %v2073 = vadd.f32 0.0, %v2072
      %v2074 = vpop.f32.mrf.mxu0
      %2075 = vmatprep.mubr.bf16.mxu0 0
      %2076 = vmatmul.mubr.bf16.gmra.mxu0 %v1741
      %v2077 = vpop.f32.mrf.mxu0
      %v2078 = vadd.f32 0.0, %v2077
      %v2079 = vpop.f32.mrf.mxu0
      %v2080 = vpop.f32.mrf.mxu0
      %v2081 = vadd.f32 0.0, %v2080
      %v2082 = vpop.f32.mrf.mxu0
      %2083 = vmatprep.mubr.bf16.mxu0 0
      %2084 = vmatmul.mubr.bf16.gmra.mxu0 %v1744
      %v2085 = vpop.f32.mrf.mxu0
      %v2086 = vadd.f32 0.0, %v2085
      %v2087 = vpop.f32.mrf.mxu0
      %v2088 = vpop.f32.mrf.mxu0
      %v2089 = vadd.f32 0.0, %v2088
      %v2090 = vpop.f32.mrf.mxu0
      %2091 = vmatprep.mubr.bf16.mxu0 0
      %2092 = vmatmul.mubr.bf16.gmra.mxu0 %v1747
      %v2093 = vpop.f32.mrf.mxu0
      %v2094 = vadd.f32 0.0, %v2093
      %v2095 = vpop.f32.mrf.mxu0
      %v2096 = vpop.f32.mrf.mxu0
      %v2097 = vadd.f32 0.0, %v2096
      %v2098 = vpop.f32.mrf.mxu0
      %2099 = vmatprep.mubr.bf16.mxu0 0
      %2100 = vmatmul.mubr.bf16.gmra.mxu0 %v1750
      %v2101 = vpop.f32.mrf.mxu0
      %v2102 = vadd.f32 0.0, %v2101
      %v2103 = vpop.f32.mrf.mxu0
      %v2104 = vpop.f32.mrf.mxu0
      %v2105 = vadd.f32 0.0, %v2104
      %v2106 = vpop.f32.mrf.mxu0
      %2107 = vmatprep.mubr.bf16.mxu0 0
      %2108 = vmatmul.mubr.bf16.gmra.mxu0 %v1753
      %v2109 = vpop.f32.mrf.mxu0
      %v2110 = vadd.f32 0.0, %v2109
      %v2111 = vpop.f32.mrf.mxu0
      %v2112 = vpop.f32.mrf.mxu0
      %v2113 = vadd.f32 0.0, %v2112
      %v2114 = vpop.f32.mrf.mxu0
      %2115 = vmatprep.mubr.bf16.mxu0 0
      %2116 = vmatmul.mubr.bf16.gmra.mxu0 %v1756
      %v2117 = vpop.f32.mrf.mxu0
      %v2118 = vadd.f32 0.0, %v2117
      %v2119 = vpop.f32.mrf.mxu0
      %v2120 = vpop.f32.mrf.mxu0
      %v2121 = vadd.f32 0.0, %v2120
      %v2122 = vpop.f32.mrf.mxu0
      %2123 = vmatprep.mubr.bf16.mxu0 0
      %2124 = vmatmul.mubr.bf16.gmra.mxu0 %v2017
      %v2125 = vpop.f32.mrf.mxu0
      %v2126 = vadd.f32 0.0, %v2125
      %v2127 = vpop.f32.mrf.mxu0
      %v2128 = vpop.f32.mrf.mxu0
      %v2129 = vadd.f32 0.0, %v2128
      %v2130 = vpop.f32.mrf.mxu0
      %2131 = vdwg.mxu0
      %v2132 = vadd.f32 %v1921, %v2054
      %v2133 = vadd.f32 %v1924, %v2057
      %v2134 = vadd.f32 %v1929, %v2062
      %v2135 = vadd.f32 %v1932, %v2065
      %v2136 = vadd.f32 %v1937, %v2070
      %v2137 = vadd.f32 %v1940, %v2073
      %v2138 = vadd.f32 %v1945, %v2078
      %v2139 = vadd.f32 %v1948, %v2081
      %v2140 = vadd.f32 %v1953, %v2086
      %v2141 = vadd.f32 %v1956, %v2089
      %v2142 = vadd.f32 %v1961, %v2094
      %v2143 = vadd.f32 %v1964, %v2097
      %v2144 = vadd.f32 %v1969, %v2102
      %v2145 = vadd.f32 %v1972, %v2105
      %v2146 = vadd.f32 %v1977, %v2110
      %v2147 = vadd.f32 %v1980, %v2113
      %v2148 = vadd.f32 %v1985, %v2118
      %v2149 = vadd.f32 %v1988, %v2121
      %v2150 = vadd.f32 %v1993, %v2126
      %v2151 = vadd.f32 %v1996, %v2129
      %v2152 = vld [vmem:[%s7] sm:$0x1]
      %v2154 = vlaneseq
      %v2155 = vshrl.u32 %v2154, 7
      %v2156 = vsub.s32 0, %v2155
      %v2157 = vrot.slane %v2152, %v2156
      %v2159 = vadd.f32 %v2132, %v2157
      %v2160 = vadd.f32 %v2133, %v2157
      %v2161 = vadd.f32 %v2134, %v2157
      %v2162 = vadd.f32 %v2135, %v2157
      %v2163 = vadd.f32 %v2136, %v2157
      %v2164 = vadd.f32 %v2137, %v2157
      %v2165 = vadd.f32 %v2138, %v2157
      %v2166 = vadd.f32 %v2139, %v2157
      %v2167 = vadd.f32 %v2140, %v2157
      %v2168 = vadd.f32 %v2141, %v2157
      %v2169 = vadd.f32 %v2142, %v2157
      %v2170 = vadd.f32 %v2143, %v2157
      %v2171 = vadd.f32 %v2144, %v2157
      %v2172 = vadd.f32 %v2145, %v2157
      %v2173 = vadd.f32 %v2146, %v2157
      %v2174 = vadd.f32 %v2147, %v2157
      %v2175 = vadd.f32 %v2148, %v2157
      %v2176 = vadd.f32 %v2149, %v2157
      %v2177 = vadd.f32 %v2150, %v2157
      %v2178 = vadd.f32 %v2151, %v2157
      %v2179 = vxor.u32 %v2159, 2147483648
      %v2180 = vxor.u32 %v2160, 2147483648
      %v2181 = vxor.u32 %v2161, 2147483648
      %v2182 = vxor.u32 %v2162, 2147483648
      %v2183 = vxor.u32 %v2163, 2147483648
      %v2184 = vxor.u32 %v2164, 2147483648
      %v2185 = vxor.u32 %v2165, 2147483648
      %v2186 = vxor.u32 %v2166, 2147483648
      %v2187 = vxor.u32 %v2167, 2147483648
      %v2188 = vxor.u32 %v2168, 2147483648
      %v2189 = vxor.u32 %v2169, 2147483648
      %v2190 = vxor.u32 %v2170, 2147483648
      %v2191 = vxor.u32 %v2171, 2147483648
      %v2192 = vxor.u32 %v2172, 2147483648
      %v2193 = vxor.u32 %v2173, 2147483648
      %v2194 = vxor.u32 %v2174, 2147483648
      %v2195 = vxor.u32 %v2175, 2147483648
      %v2196 = vxor.u32 %v2176, 2147483648
      %v2197 = vxor.u32 %v2177, 2147483648
      %v2198 = vxor.u32 %v2178, 2147483648
      %v2199 = vmul.f32 %v2179, 1.442695
      %v2200 = vpow.pop %v2199
      %v2201 = vmul.f32 %v2180, 1.442695
      %v2202 = vpow.pop %v2201
      %v2203 = vmul.f32 %v2181, 1.442695
      %v2204 = vpow.pop %v2203
      %v2205 = vmul.f32 %v2182, 1.442695
      %v2206 = vpow.pop %v2205
      %v2207 = vmul.f32 %v2183, 1.442695
      %v2208 = vpow.pop %v2207
      %v2209 = vmul.f32 %v2184, 1.442695
      %v2210 = vpow.pop %v2209
      %v2211 = vmul.f32 %v2185, 1.442695
      %v2212 = vpow.pop %v2211
      %v2213 = vmul.f32 %v2186, 1.442695
      %v2214 = vpow.pop %v2213
      %v2215 = vmul.f32 %v2187, 1.442695
      %v2216 = vpow.pop %v2215
      %v2217 = vmul.f32 %v2188, 1.442695
      %v2218 = vpow.pop %v2217
      %v2219 = vmul.f32 %v2189, 1.442695
      %v2220 = vpow.pop %v2219
      %v2221 = vmul.f32 %v2190, 1.442695
      %v2222 = vpow.pop %v2221
      %v2223 = vmul.f32 %v2191, 1.442695
      %v2224 = vpow.pop %v2223
      %v2225 = vmul.f32 %v2192, 1.442695
      %v2226 = vpow.pop %v2225
      %v2227 = vmul.f32 %v2193, 1.442695
      %v2228 = vpow.pop %v2227
      %v2229 = vmul.f32 %v2194, 1.442695
      %v2230 = vpow.pop %v2229
      %v2231 = vmul.f32 %v2195, 1.442695
      %v2232 = vpow.pop %v2231
      %v2233 = vmul.f32 %v2196, 1.442695
      %v2234 = vpow.pop %v2233
      %v2235 = vmul.f32 %v2197, 1.442695
      %v2236 = vpow.pop %v2235
      %v2237 = vmul.f32 %v2198, 1.442695
      %v2238 = vpow.pop %v2237
      %v2239 = vadd.f32 %v2200, 1.0
      %v2240 = vadd.f32 %v2202, 1.0
      %v2241 = vadd.f32 %v2204, 1.0
      %v2242 = vadd.f32 %v2206, 1.0
      %v2243 = vadd.f32 %v2208, 1.0
      %v2244 = vadd.f32 %v2210, 1.0
      %v2245 = vadd.f32 %v2212, 1.0
      %v2246 = vadd.f32 %v2214, 1.0
      %v2247 = vadd.f32 %v2216, 1.0
      %v2248 = vadd.f32 %v2218, 1.0
      %v2249 = vadd.f32 %v2220, 1.0
      %v2250 = vadd.f32 %v2222, 1.0
      %v2251 = vadd.f32 %v2224, 1.0
      %v2252 = vadd.f32 %v2226, 1.0
      %v2253 = vadd.f32 %v2228, 1.0
      %v2254 = vadd.f32 %v2230, 1.0
      %v2255 = vadd.f32 %v2232, 1.0
      %v2256 = vadd.f32 %v2234, 1.0
      %v2257 = vadd.f32 %v2236, 1.0
      %v2258 = vadd.f32 %v2238, 1.0
      %v2259 = vrcp.pop %v2239
      %v2260 = vmul.f32 1.0, %v2259
      %v2261 = vrcp.pop %v2240
      %v2262 = vmul.f32 1.0, %v2261
      %v2263 = vrcp.pop %v2241
      %v2264 = vmul.f32 1.0, %v2263
      %v2265 = vrcp.pop %v2242
      %v2266 = vmul.f32 1.0, %v2265
      %v2267 = vrcp.pop %v2243
      %v2268 = vmul.f32 1.0, %v2267
      %v2269 = vrcp.pop %v2244
      %v2270 = vmul.f32 1.0, %v2269
      %v2271 = vrcp.pop %v2245
      %v2272 = vmul.f32 1.0, %v2271
      %v2273 = vrcp.pop %v2246
      %v2274 = vmul.f32 1.0, %v2273
      %v2275 = vrcp.pop %v2247
      %v2276 = vmul.f32 1.0, %v2275
      %v2277 = vrcp.pop %v2248
      %v2278 = vmul.f32 1.0, %v2277
      %v2279 = vrcp.pop %v2249
      %v2280 = vmul.f32 1.0, %v2279
      %v2281 = vrcp.pop %v2250
      %v2282 = vmul.f32 1.0, %v2281
      %v2283 = vrcp.pop %v2251
      %v2284 = vmul.f32 1.0, %v2283
      %v2285 = vrcp.pop %v2252
      %v2286 = vmul.f32 1.0, %v2285
      %v2287 = vrcp.pop %v2253
      %v2288 = vmul.f32 1.0, %v2287
      %v2289 = vrcp.pop %v2254
      %v2290 = vmul.f32 1.0, %v2289
      %v2291 = vrcp.pop %v2255
      %v2292 = vmul.f32 1.0, %v2291
      %v2293 = vrcp.pop %v2256
      %v2294 = vmul.f32 1.0, %v2293
      %v2295 = vrcp.pop %v2257
      %v2296 = vmul.f32 1.0, %v2295
      %v2297 = vrcp.pop %v2258
      %v2298 = vmul.f32 1.0, %v2297
      %2319 = vrot.lane.b32.xlu0 %v2260, 96
      %v2320 = vpop.permute.xlu0 %2319
      %2321 = vrot.lane.b32.xlu0 %v2262, 96
      %v2322 = vpop.permute.xlu0 %2321
      %2323 = vrot.lane.b32.xlu0 %v2264, 96
      %v2324 = vpop.permute.xlu0 %2323
      %2325 = vrot.lane.b32.xlu0 %v2266, 96
      %v2326 = vpop.permute.xlu0 %2325
      %2327 = vrot.lane.b32.xlu0 %v2268, 96
      %v2328 = vpop.permute.xlu0 %2327
      %2329 = vrot.lane.b32.xlu0 %v2270, 96
      %v2330 = vpop.permute.xlu0 %2329
      %2331 = vrot.lane.b32.xlu0 %v2272, 96
      %v2332 = vpop.permute.xlu0 %2331
      %2333 = vrot.lane.b32.xlu0 %v2274, 96
      %v2334 = vpop.permute.xlu0 %2333
      %2335 = vrot.lane.b32.xlu0 %v2276, 96
      %v2336 = vpop.permute.xlu0 %2335
      %2337 = vrot.lane.b32.xlu0 %v2278, 96
      %v2338 = vpop.permute.xlu0 %2337
      %2339 = vrot.lane.b32.xlu0 %v2280, 96
      %v2340 = vpop.permute.xlu0 %2339
      %2341 = vrot.lane.b32.xlu0 %v2282, 96
      %v2342 = vpop.permute.xlu0 %2341
      %2343 = vrot.lane.b32.xlu0 %v2284, 96
      %v2344 = vpop.permute.xlu0 %2343
      %2345 = vrot.lane.b32.xlu0 %v2286, 96
      %v2346 = vpop.permute.xlu0 %2345
      %2347 = vrot.lane.b32.xlu0 %v2288, 96
      %v2348 = vpop.permute.xlu0 %2347
      %2349 = vrot.lane.b32.xlu0 %v2290, 96
      %v2350 = vpop.permute.xlu0 %2349
      %2351 = vrot.lane.b32.xlu0 %v2292, 96
      %v2352 = vpop.permute.xlu0 %2351
      %2353 = vrot.lane.b32.xlu0 %v2294, 96
      %v2354 = vpop.permute.xlu0 %2353
      %2355 = vrot.lane.b32.xlu0 %v2296, 96
      %v2356 = vpop.permute.xlu0 %2355
      %2357 = vrot.lane.b32.xlu0 %v2298, 96
      %v2358 = vpop.permute.xlu0 %2357
      %v2379 = vmul.f32 %v2159, %v2320
      %v2380 = vmul.f32 %v2160, %v2322
      %v2381 = vmul.f32 %v2161, %v2324
      %v2382 = vmul.f32 %v2162, %v2326
      %v2383 = vmul.f32 %v2163, %v2328
      %v2384 = vmul.f32 %v2164, %v2330
      %v2385 = vmul.f32 %v2165, %v2332
      %v2386 = vmul.f32 %v2166, %v2334
      %v2387 = vmul.f32 %v2167, %v2336
      %v2388 = vmul.f32 %v2168, %v2338
      %v2389 = vmul.f32 %v2169, %v2340
      %v2390 = vmul.f32 %v2170, %v2342
      %v2391 = vmul.f32 %v2171, %v2344
      %v2392 = vmul.f32 %v2172, %v2346
      %v2393 = vmul.f32 %v2173, %v2348
      %v2394 = vmul.f32 %v2174, %v2350
      %v2395 = vmul.f32 %v2175, %v2352
      %v2396 = vmul.f32 %v2176, %v2354
      %v2397 = vmul.f32 %v2177, %v2356
      %v2398 = vmul.f32 %v2178, %v2358
      %2419 = vrot.lane.b32.xlu0 %v2159, 64
      %v2420 = vpop.permute.xlu0 %2419
      %2421 = vrot.lane.b32.xlu0 %v2160, 64
      %v2422 = vpop.permute.xlu0 %2421
      %2423 = vrot.lane.b32.xlu0 %v2161, 64
      %v2424 = vpop.permute.xlu0 %2423
      %2425 = vrot.lane.b32.xlu0 %v2162, 64
      %v2426 = vpop.permute.xlu0 %2425
      %2427 = vrot.lane.b32.xlu0 %v2163, 64
      %v2428 = vpop.permute.xlu0 %2427
      %2429 = vrot.lane.b32.xlu0 %v2164, 64
      %v2430 = vpop.permute.xlu0 %2429
      %2431 = vrot.lane.b32.xlu0 %v2165, 64
      %v2432 = vpop.permute.xlu0 %2431
      %2433 = vrot.lane.b32.xlu0 %v2166, 64
      %v2434 = vpop.permute.xlu0 %2433
      %2435 = vrot.lane.b32.xlu0 %v2167, 64
      %v2436 = vpop.permute.xlu0 %2435
      %2437 = vrot.lane.b32.xlu0 %v2168, 64
      %v2438 = vpop.permute.xlu0 %2437
      %2439 = vrot.lane.b32.xlu0 %v2169, 64
      %v2440 = vpop.permute.xlu0 %2439
      %2441 = vrot.lane.b32.xlu0 %v2170, 64
      %v2442 = vpop.permute.xlu0 %2441
      %2443 = vrot.lane.b32.xlu0 %v2171, 64
      %v2444 = vpop.permute.xlu0 %2443
      %2445 = vrot.lane.b32.xlu0 %v2172, 64
      %v2446 = vpop.permute.xlu0 %2445
      %2447 = vrot.lane.b32.xlu0 %v2173, 64
      %v2448 = vpop.permute.xlu0 %2447
      %2449 = vrot.lane.b32.xlu0 %v2174, 64
      %v2450 = vpop.permute.xlu0 %2449
      %2451 = vrot.lane.b32.xlu0 %v2175, 64
      %v2452 = vpop.permute.xlu0 %2451
      %2453 = vrot.lane.b32.xlu0 %v2176, 64
      %v2454 = vpop.permute.xlu0 %2453
      %2455 = vrot.lane.b32.xlu0 %v2177, 64
      %v2456 = vpop.permute.xlu0 %2455
      %2457 = vrot.lane.b32.xlu0 %v2178, 64
      %v2458 = vpop.permute.xlu0 %2457
      %v2479 = vadd.f32 %v2379, %v2420
      %v2480 = vadd.f32 %v2380, %v2422
      %v2481 = vadd.f32 %v2381, %v2424
      %v2482 = vadd.f32 %v2382, %v2426
      %v2483 = vadd.f32 %v2383, %v2428
      %v2484 = vadd.f32 %v2384, %v2430
      %v2485 = vadd.f32 %v2385, %v2432
      %v2486 = vadd.f32 %v2386, %v2434
      %v2487 = vadd.f32 %v2387, %v2436
      %v2488 = vadd.f32 %v2388, %v2438
      %v2489 = vadd.f32 %v2389, %v2440
      %v2490 = vadd.f32 %v2390, %v2442
      %v2491 = vadd.f32 %v2391, %v2444
      %v2492 = vadd.f32 %v2392, %v2446
      %v2493 = vadd.f32 %v2393, %v2448
      %v2494 = vadd.f32 %v2394, %v2450
      %v2495 = vadd.f32 %v2395, %v2452
      %v2496 = vadd.f32 %v2396, %v2454
      %v2497 = vadd.f32 %v2397, %v2456
      %v2498 = vadd.f32 %v2398, %v2458
      %v2499 = vmax.f32 %v2479, 0.0
      %v2500 = vmax.f32 %v2480, 0.0
      %v2501 = vmax.f32 %v2481, 0.0
      %v2502 = vmax.f32 %v2482, 0.0
      %v2503 = vmax.f32 %v2483, 0.0
      %v2504 = vmax.f32 %v2484, 0.0
      %v2505 = vmax.f32 %v2485, 0.0
      %v2506 = vmax.f32 %v2486, 0.0
      %v2507 = vmax.f32 %v2487, 0.0
      %v2508 = vmax.f32 %v2488, 0.0
      %v2509 = vmax.f32 %v2489, 0.0
      %v2510 = vmax.f32 %v2490, 0.0
      %v2511 = vmax.f32 %v2491, 0.0
      %v2512 = vmax.f32 %v2492, 0.0
      %v2513 = vmax.f32 %v2493, 0.0
      %v2514 = vmax.f32 %v2494, 0.0
      %v2515 = vmax.f32 %v2495, 0.0
      %v2516 = vmax.f32 %v2496, 0.0
      %v2517 = vmax.f32 %v2497, 0.0
      %v2518 = vmax.f32 %v2498, 0.0
      %v2519 = vld [vmem:[%s8] sm:$0xff]
      %v2520 = vld [vmem:[%s8 + $0x8] sm:$0xff]
      %v2521 = vld [vmem:[%s8 + $0x10] sm:$0xff]
      %v2522 = vld [vmem:[%s8 + $0x18] sm:$0xff]
      %v2523 = vld [vmem:[%s8 + $0x20] sm:$0xff]
      %v2524 = vld [vmem:[%s8 + $0x28] sm:$0xff]
      %v2525 = vld [vmem:[%s8 + $0x30] sm:$0xff]
      %v2526 = vld [vmem:[%s8 + $0x38] sm:$0xff]
      %v2527 = vld [vmem:[%s8 + $0x40] sm:$0xff]
      %v2528 = vld [vmem:[%s8 + $0x48] sm:$0xff]
      %v2529 = vld [vmem:[%s8 + $0x50] sm:$0xff]
      %v2530 = vld [vmem:[%s8 + $0x58] sm:$0xff]
      %v2531 = vld [vmem:[%s8 + $0x60] sm:$0xff]
      %v2532 = vld [vmem:[%s8 + $0x68] sm:$0xff]
      %v2533 = vld [vmem:[%s8 + $0x70] sm:$0xff]
      %v2534 = vld [vmem:[%s8 + $0x78] sm:$0xff]
      %v2535 = vld [vmem:[%s8 + $0x80] sm:$0xff]
      %v2536 = vld [vmem:[%s8 + $0x88] sm:$0xff]
      %v2537 = vld [vmem:[%s8 + $0x90] sm:$0xff]
      %v2538 = vld [vmem:[%s8 + $0x98] sm:$0xff]
      %v2539 = vmul.f32 %v2499, %v2519
      %v2540 = vmul.f32 %v2500, %v2520
      %v2541 = vmul.f32 %v2501, %v2521
      %v2542 = vmul.f32 %v2502, %v2522
      %v2543 = vmul.f32 %v2503, %v2523
      %v2544 = vmul.f32 %v2504, %v2524
      %v2545 = vmul.f32 %v2505, %v2525
      %v2546 = vmul.f32 %v2506, %v2526
      %v2547 = vmul.f32 %v2507, %v2527
      %v2548 = vmul.f32 %v2508, %v2528
      %v2549 = vmul.f32 %v2509, %v2529
      %v2550 = vmul.f32 %v2510, %v2530
      %v2551 = vmul.f32 %v2511, %v2531
      %v2552 = vmul.f32 %v2512, %v2532
      %v2553 = vmul.f32 %v2513, %v2533
      %v2554 = vmul.f32 %v2514, %v2534
      %v2555 = vmul.f32 %v2515, %v2535
      %v2556 = vmul.f32 %v2516, %v2536
      %v2557 = vmul.f32 %v2517, %v2537
      %v2558 = vmul.f32 %v2518, %v2538
      %2579 = vrot.lane.b32.xlu0 %v2519, 96
      %v2580 = vpop.permute.xlu0 %2579
      %2581 = vrot.lane.b32.xlu0 %v2520, 96
      %v2582 = vpop.permute.xlu0 %2581
      %2583 = vrot.lane.b32.xlu0 %v2521, 96
      %v2584 = vpop.permute.xlu0 %2583
      %2585 = vrot.lane.b32.xlu0 %v2522, 96
      %v2586 = vpop.permute.xlu0 %2585
      %2587 = vrot.lane.b32.xlu0 %v2523, 96
      %v2588 = vpop.permute.xlu0 %2587
      %2589 = vrot.lane.b32.xlu0 %v2524, 96
      %v2590 = vpop.permute.xlu0 %2589
      %2591 = vrot.lane.b32.xlu0 %v2525, 96
      %v2592 = vpop.permute.xlu0 %2591
      %2593 = vrot.lane.b32.xlu0 %v2526, 96
      %v2594 = vpop.permute.xlu0 %2593
      %2595 = vrot.lane.b32.xlu0 %v2527, 96
      %v2596 = vpop.permute.xlu0 %2595
      %2597 = vrot.lane.b32.xlu0 %v2528, 96
      %v2598 = vpop.permute.xlu0 %2597
      %2599 = vrot.lane.b32.xlu0 %v2529, 96
      %v2600 = vpop.permute.xlu0 %2599
      %2601 = vrot.lane.b32.xlu0 %v2530, 96
      %v2602 = vpop.permute.xlu0 %2601
      %2603 = vrot.lane.b32.xlu0 %v2531, 96
      %v2604 = vpop.permute.xlu0 %2603
      %2605 = vrot.lane.b32.xlu0 %v2532, 96
      %v2606 = vpop.permute.xlu0 %2605
      %2607 = vrot.lane.b32.xlu0 %v2533, 96
      %v2608 = vpop.permute.xlu0 %2607
      %2609 = vrot.lane.b32.xlu0 %v2534, 96
      %v2610 = vpop.permute.xlu0 %2609
      %2611 = vrot.lane.b32.xlu0 %v2535, 96
      %v2612 = vpop.permute.xlu0 %2611
      %2613 = vrot.lane.b32.xlu0 %v2536, 96
      %v2614 = vpop.permute.xlu0 %2613
      %2615 = vrot.lane.b32.xlu0 %v2537, 96
      %v2616 = vpop.permute.xlu0 %2615
      %2617 = vrot.lane.b32.xlu0 %v2538, 96
      %v2618 = vpop.permute.xlu0 %2617
      %v2639 = vadd.f32 %v2539, %v2580
      %v2640 = vadd.f32 %v2540, %v2582
      %v2641 = vadd.f32 %v2541, %v2584
      %v2642 = vadd.f32 %v2542, %v2586
      %v2643 = vadd.f32 %v2543, %v2588
      %v2644 = vadd.f32 %v2544, %v2590
      %v2645 = vadd.f32 %v2545, %v2592
      %v2646 = vadd.f32 %v2546, %v2594
      %v2647 = vadd.f32 %v2547, %v2596
      %v2648 = vadd.f32 %v2548, %v2598
      %v2649 = vadd.f32 %v2549, %v2600
      %v2650 = vadd.f32 %v2550, %v2602
      %v2651 = vadd.f32 %v2551, %v2604
      %v2652 = vadd.f32 %v2552, %v2606
      %v2653 = vadd.f32 %v2553, %v2608
      %v2654 = vadd.f32 %v2554, %v2610
      %v2655 = vadd.f32 %v2555, %v2612
      %v2656 = vadd.f32 %v2556, %v2614
      %v2657 = vadd.f32 %v2557, %v2616
      %v2658 = vadd.f32 %v2558, %v2618
      %v2659 = vmax.f32 %v2639, 0.0
      %v2660 = vmax.f32 %v2640, 0.0
      %v2661 = vmax.f32 %v2641, 0.0
      %v2662 = vmax.f32 %v2642, 0.0
      %v2663 = vmax.f32 %v2643, 0.0
      %v2664 = vmax.f32 %v2644, 0.0
      %v2665 = vmax.f32 %v2645, 0.0
      %v2666 = vmax.f32 %v2646, 0.0
      %v2667 = vmax.f32 %v2647, 0.0
      %v2668 = vmax.f32 %v2648, 0.0
      %v2669 = vmax.f32 %v2649, 0.0
      %v2670 = vmax.f32 %v2650, 0.0
      %v2671 = vmax.f32 %v2651, 0.0
      %v2672 = vmax.f32 %v2652, 0.0
      %v2673 = vmax.f32 %v2653, 0.0
      %v2674 = vmax.f32 %v2654, 0.0
      %v2675 = vmax.f32 %v2655, 0.0
      %v2676 = vmax.f32 %v2656, 0.0
      %v2677 = vmax.f32 %v2657, 0.0
      %v2678 = vmax.f32 %v2658, 0.0
      %2681 = vrot.lane.b32.xlu0 %v2661, 32
      %v2682 = vpop.permute.xlu0 %2681
      %2683 = vrot.lane.b32.xlu0 %v2662, 32
      %v2684 = vpop.permute.xlu0 %2683
      %2689 = vrot.lane.b32.xlu0 %v2663, 64
      %v2690 = vpop.permute.xlu0 %2689
      %2691 = vrot.lane.b32.xlu0 %v2664, 64
      %v2692 = vpop.permute.xlu0 %2691
      %2697 = vrot.lane.b32.xlu0 %v2665, 96
      %v2698 = vpop.permute.xlu0 %2697
      %2699 = vrot.lane.b32.xlu0 %v2666, 96
      %v2700 = vpop.permute.xlu0 %2699
      %2705 = vrot.lane.b32.xlu0 %v2669, 32
      %v2706 = vpop.permute.xlu0 %2705
      %2707 = vrot.lane.b32.xlu0 %v2670, 32
      %v2708 = vpop.permute.xlu0 %2707
      %2713 = vrot.lane.b32.xlu0 %v2671, 64
      %v2714 = vpop.permute.xlu0 %2713
      %2715 = vrot.lane.b32.xlu0 %v2672, 64
      %v2716 = vpop.permute.xlu0 %2715
      %2721 = vrot.lane.b32.xlu0 %v2673, 96
      %v2722 = vpop.permute.xlu0 %2721
      %2723 = vrot.lane.b32.xlu0 %v2674, 96
      %v2724 = vpop.permute.xlu0 %2723
      %2729 = vrot.lane.b32.xlu0 %v2677, 32
      %v2730 = vpop.permute.xlu0 %2729
      %2731 = vrot.lane.b32.xlu0 %v2678, 32
      %v2732 = vpop.permute.xlu0 %2731
      %v2735 = vsel %vm1092, %v2659, %v2682
      %v2736 = vsel %vm1092, %v2660, %v2684
      %v2737 = vsel %vm1450, %v2735, %v2690
      %v2738 = vsel %vm1450, %v2736, %v2692
      %vm2739 = vcmask 785408
      %v2740 = vsel %vm2739, %v2737, %v2698
      %v2741 = vsel %vm2739, %v2738, %v2700
      %v2742 = vsel %vm1092, %v2667, %v2706
      %v2743 = vsel %vm1092, %v2668, %v2708
      %v2744 = vsel %vm1450, %v2742, %v2714
      %v2745 = vsel %vm1450, %v2743, %v2716
      %v2746 = vsel %vm2739, %v2744, %v2722
      %v2747 = vsel %vm2739, %v2745, %v2724
      %v2748 = vsel %vm1092, %v2675, %v2730
      %v2749 = vsel %vm1092, %v2676, %v2732
      %v2750 = vpack.c.bf16 %v2741, %v2740
      %v2751 = vpack.c.bf16 %v2747, %v2746
      %v2752 = vpack.c.bf16 %v2749, %v2748
      %v2753 = vld [vmem:[%s9] sm:$0xf]
      %v2754 = vld [vmem:[%s9 + $0x4] sm:$0xf]
      %v2755 = vld [vmem:[%s9 + $0x8] sm:$0xf]
      %v2756 = vld [vmem:[%s9 + $0xc] sm:$0xf]
      %v2757 = vld [vmem:[%s9 + $0x10] sm:$0xf]
      %v2758 = vld [vmem:[%s9 + $0x14] sm:$0xf]
      %v2759 = vld [vmem:[%s9 + $0x18] sm:$0xf]
      %v2760 = vld [vmem:[%s9 + $0x1c] sm:$0xf]
      %v2761 = vld [vmem:[%s9 + $0x20] sm:$0xf]
      %v2762 = vld [vmem:[%s9 + $0x24] sm:$0xf]
      %v2763 = vld [vmem:[%s9 + $0x28] sm:$0xf]
      %v2764 = vld [vmem:[%s9 + $0x2c] sm:$0xf]
      %v2765 = vld [vmem:[%s9 + $0x30] sm:$0xf]
      %v2766 = vld [vmem:[%s9 + $0x34] sm:$0xf]
      %v2767 = vld [vmem:[%s9 + $0x38] sm:$0xf]
      %v2768 = vld [vmem:[%s9 + $0x3c] sm:$0xf]
      %v2769 = vld [vmem:[%s9 + $0x40] sm:$0xf]
      %v2770 = vld [vmem:[%s9 + $0x44] sm:$0xf]
      %v2771 = vld [vmem:[%s9 + $0x48] sm:$0xf]
      %v2772 = vld [vmem:[%s9 + $0x4c] sm:$0xf]
      %v2773 = vld [vmem:[%s9 + $0x50] sm:$0xf]
      %v2774 = vld [vmem:[%s9 + $0x54] sm:$0xf]
      %v2775 = vld [vmem:[%s9 + $0x58] sm:$0xf]
      %v2776 = vld [vmem:[%s9 + $0x5c] sm:$0xf]
      %v2777 = vld [vmem:[%s9 + $0x60] sm:$0xf]
      %v2778 = vld [vmem:[%s9 + $0x64] sm:$0xf]
      %v2779 = vld [vmem:[%s9 + $0x68] sm:$0xf]
      %v2780 = vld [vmem:[%s9 + $0x6c] sm:$0xf]
      %v2781 = vld [vmem:[%s9 + $0x70] sm:$0xf]
      %v2782 = vld [vmem:[%s9 + $0x74] sm:$0xf]
      %v2783 = vld [vmem:[%s9 + $0x78] sm:$0xf]
      %v2784 = vld [vmem:[%s9 + $0x7c] sm:$0xf]
      %v2785 = vld [vmem:[%s9 + $0x80] sm:$0xf]
      %v2786 = vld [vmem:[%s9 + $0x84] sm:$0xf]
      %v2787 = vld [vmem:[%s9 + $0x88] sm:$0xf]
      %v2788 = vld [vmem:[%s9 + $0x8c] sm:$0xf]
      %v2789 = vld [vmem:[%s9 + $0x90] sm:$0xf]
      %v2790 = vld [vmem:[%s9 + $0x94] sm:$0xf]
      %v2791 = vld [vmem:[%s9 + $0x98] sm:$0xf]
      %v2792 = vld [vmem:[%s9 + $0x9c] sm:$0xf]
      %v2793 = vld [vmem:[%s10] sm:$0x1]
      %v2795 = vlaneseq
      %v2796 = vshrl.u32 %v2795, 7
      %v2797 = vsub.s32 0, %v2796
      %v2798 = vrot.slane %v2793, %v2797
      %v2840 = vunpack.c.l.b16 %v2753
      %v2841 = vunpack.c.l.b16 %v2754
      %v2842 = vunpack.c.l.b16 %v2755
      %v2843 = vunpack.c.l.b16 %v2756
      %v2844 = vunpack.c.l.b16 %v2757
      %v2845 = vunpack.c.l.b16 %v2758
      %v2846 = vunpack.c.l.b16 %v2759
      %v2847 = vunpack.c.l.b16 %v2760
      %v2848 = vunpack.c.l.b16 %v2761
      %v2849 = vunpack.c.l.b16 %v2762
      %v2850 = vunpack.c.l.b16 %v2763
      %v2851 = vunpack.c.l.b16 %v2764
      %v2852 = vunpack.c.l.b16 %v2765
      %v2853 = vunpack.c.l.b16 %v2766
      %v2854 = vunpack.c.l.b16 %v2767
      %v2855 = vunpack.c.l.b16 %v2768
      %v2856 = vunpack.c.l.b16 %v2769
      %v2857 = vunpack.c.l.b16 %v2770
      %v2858 = vunpack.c.l.b16 %v2771
      %v2859 = vunpack.c.l.b16 %v2772
      %v2860 = vunpack.c.l.b16 %v2773
      %v2861 = vunpack.c.l.b16 %v2774
      %v2862 = vunpack.c.l.b16 %v2775
      %v2863 = vunpack.c.l.b16 %v2776
      %v2864 = vunpack.c.l.b16 %v2777
      %v2865 = vunpack.c.l.b16 %v2778
      %v2866 = vunpack.c.l.b16 %v2779
      %v2867 = vunpack.c.l.b16 %v2780
      %v2868 = vunpack.c.l.b16 %v2781
      %v2869 = vunpack.c.l.b16 %v2782
      %v2870 = vunpack.c.l.b16 %v2783
      %v2871 = vunpack.c.l.b16 %v2784
      %v2872 = vunpack.c.l.b16 %v2785
      %v2873 = vunpack.c.l.b16 %v2786
      %v2874 = vunpack.c.l.b16 %v2787
      %v2875 = vunpack.c.l.b16 %v2788
      %v2876 = vunpack.c.l.b16 %v2789
      %v2877 = vunpack.c.l.b16 %v2790
      %v2878 = vunpack.c.l.b16 %v2791
      %v2879 = vunpack.c.l.b16 %v2792
      %v2880 = vpack.c.b16 %v2841, %v2840
      %v2881 = vpack.c.b16 %v2843, %v2842
      %v2882 = vpack.c.b16 %v2845, %v2844
      %v2883 = vpack.c.b16 %v2847, %v2846
      %v2884 = vpack.c.b16 %v2849, %v2848
      %v2885 = vpack.c.b16 %v2851, %v2850
      %v2886 = vpack.c.b16 %v2853, %v2852
      %v2887 = vpack.c.b16 %v2855, %v2854
      %v2888 = vpack.c.b16 %v2857, %v2856
      %v2889 = vpack.c.b16 %v2859, %v2858
      %v2890 = vpack.c.b16 %v2861, %v2860
      %v2891 = vpack.c.b16 %v2863, %v2862
      %v2892 = vpack.c.b16 %v2865, %v2864
      %v2893 = vpack.c.b16 %v2867, %v2866
      %v2894 = vpack.c.b16 %v2869, %v2868
      %v2895 = vpack.c.b16 %v2871, %v2870
      %v2896 = vpack.c.b16 %v2873, %v2872
      %v2897 = vpack.c.b16 %v2875, %v2874
      %v2898 = vpack.c.b16 %v2877, %v2876
      %v2899 = vpack.c.b16 %v2879, %v2878
      %v2921 = vsel %vm1450, %v2752, 0
      %2923 = vmatprep.subr.bf16.mxu0 0
      %2924 = vmatpush1.bf16.msra.mxu0 %v2887
      %2925 = vmatprep.subr.bf16.mxu0 0
      %2926 = vmatpush1.bf16.msra.mxu0 %v2886
      %2927 = vmatprep.subr.bf16.mxu0 0
      %2928 = vmatpush1.bf16.msra.mxu0 %v2885
      %2929 = vmatprep.subr.bf16.mxu0 0
      %2930 = vmatpush1.bf16.msra.mxu0 %v2884
      %2931 = vmatprep.subr.bf16.mxu0 0
      %2932 = vmatpush1.bf16.msra.mxu0 %v2883
      %2933 = vmatprep.subr.bf16.mxu0 0
      %2934 = vmatpush1.bf16.msra.mxu0 %v2882
      %2935 = vmatprep.subr.bf16.mxu0 0
      %2936 = vmatpush1.bf16.msra.mxu0 %v2881
      %2937 = vmatprep.subr.bf16.mxu0 0
      %2938 = vmatpush1.bf16.msra.mxu0 %v2880
      %2939 = vmatprep.subr.bf16.mxu0 0
      %2940 = vmatpush2.bf16.msra.mxu0 %v2895
      %2941 = vmatprep.subr.bf16.mxu0 0
      %2942 = vmatpush2.bf16.msra.mxu0 %v2894
      %2943 = vmatprep.subr.bf16.mxu0 0
      %2944 = vmatpush2.bf16.msra.mxu0 %v2893
      %2945 = vmatprep.subr.bf16.mxu0 0
      %2946 = vmatpush2.bf16.msra.mxu0 %v2892
      %2947 = vmatprep.subr.bf16.mxu0 0
      %2948 = vmatpush2.bf16.msra.mxu0 %v2891
      %2949 = vmatprep.subr.bf16.mxu0 0
      %2950 = vmatpush2.bf16.msra.mxu0 %v2890
      %2951 = vmatprep.subr.bf16.mxu0 0
      %2952 = vmatpush2.bf16.msra.mxu0 %v2889
      %2953 = vmatprep.subr.bf16.mxu0 0
      %2954 = vmatpush2.bf16.msra.mxu0 %v2888
      %2955 = vmatprep.mubr.bf16.mxu0 %v2751
      %2956 = vmatmul.mubr.bf16.gmra.mxu0 %v2750
      %v2957 = vpop.f32.mrf.mxu0
      %v2958 = vadd.f32 %v2798, %v2957
      %v2959 = vpop.f32.mrf.mxu0
      %v2960 = vpop.f32.mrf.mxu0
      %v2961 = vadd.f32 %v2798, %v2960
      %v2962 = vpop.f32.mrf.mxu0
      %2963 = vdwg.mxu0
      %2964 = vmatprep.subr.bf16.mxu0 0
      %2965 = vmatpush1.bf16.msra.mxu0 0
      %2966 = vmatprep.subr.bf16.mxu0 0
      %2967 = vmatpush1.bf16.msra.mxu0 0
      %2968 = vmatprep.subr.bf16.mxu0 0
      %2969 = vmatpush1.bf16.msra.mxu0 0
      %2970 = vmatprep.subr.bf16.mxu0 0
      %2971 = vmatpush1.bf16.msra.mxu0 0
      %2972 = vmatprep.subr.bf16.mxu0 0
      %2973 = vmatpush1.bf16.msra.mxu0 %v2899
      %2974 = vmatprep.subr.bf16.mxu0 0
      %2975 = vmatpush1.bf16.msra.mxu0 %v2898
      %2976 = vmatprep.subr.bf16.mxu0 0
      %2977 = vmatpush1.bf16.msra.mxu0 %v2897
      %2978 = vmatprep.subr.bf16.mxu0 0
      %2979 = vmatpush1.bf16.msra.mxu0 %v2896
      %2980 = vmatprep.subr.bf16.mxu0 0
      %2981 = vmatpush2.bf16.msra.mxu0 0
      %2982 = vmatprep.subr.bf16.mxu0 0
      %2983 = vmatpush2.bf16.msra.mxu0 0
      %2984 = vmatprep.subr.bf16.mxu0 0
      %2985 = vmatpush2.bf16.msra.mxu0 0
      %2986 = vmatprep.subr.bf16.mxu0 0
      %2987 = vmatpush2.bf16.msra.mxu0 0
      %2988 = vmatprep.subr.bf16.mxu0 0
      %2989 = vmatpush2.bf16.msra.mxu0 0
      %2990 = vmatprep.subr.bf16.mxu0 0
      %2991 = vmatpush2.bf16.msra.mxu0 0
      %2992 = vmatprep.subr.bf16.mxu0 0
      %2993 = vmatpush2.bf16.msra.mxu0 0
      %2994 = vmatprep.subr.bf16.mxu0 0
      %2995 = vmatpush2.bf16.msra.mxu0 0
      %2996 = vmatprep.mubr.bf16.mxu0 0
      %2997 = vmatmul.mubr.bf16.gmra.mxu0 %v2921
      %v2998 = vpop.f32.mrf.mxu0
      %v2999 = vadd.f32 %v2958, %v2998
      %v3000 = vpop.f32.mrf.mxu0
      %v3001 = vpop.f32.mrf.mxu0
      %v3002 = vadd.f32 %v2961, %v3001
      %v3003 = vpop.f32.mrf.mxu0
      %3004 = vdwg.mxu0
      %3005 = vst [vmem:[%s386] sm:$0xff] %v2999
      %3006 = vst [vmem:[%s386 + $0x8] sm:$0xff] %v3002
      %p3007 = scmp.lt.s32.totalorder %s22, 1
      %s3008 = scalar_select %p3007, %s22, 1
      %s3009 = smul.addr %s3008, 2
      %s3010 = smul.addr %s3009, 8
      %s3011 = scalar_lea.vmem %s11, %s3010
      // Predicated region
      $region65: #{t_stconv_forward.1} parent=63 // pred_check
        %p3012 = pneg %p276
      $region66: #{t_stconv_forward.1} parent=63 // pred_check_branch
        %3014 = sbr.rel (%p3012) target = $region68
      $region67: #{t_stconv_forward.1} parent=63 // pred_region
        _
      $region68: #{t_stconv_forward.1} parent=63 // pred_fallthru
        _
    $region64: #{t_stconv_forward.1} parent=5 // pred_fallthru
      _
    %p3015 = scmp.le.s32.totalorder 2, %s17
    // Predicated region
    $region69: #{t_stconv_forward.1} parent=5 // pred_check
      %p3016 = pneg %p3015
    $region70: #{t_stconv_forward.1} parent=5 // pred_check_branch
      %3018 = sbr.rel (%p3016) target = $region72
    $region71: #{t_stconv_forward.1} parent=5 // pred_region
      %s3019 = ssub.s32 %s17, 2
      // Predicated region
      $region73: #{t_stconv_forward.1} parent=71 // pred_check
        %p3020 = pneg %p282
      $region74: #{t_stconv_forward.1} parent=71 // pred_check_branch
        %3022 = sbr.rel (%p3020) target = $region76
      $region75: #{t_stconv_forward.1} parent=71 // pred_region
        %p3023 = scmp.lt.s32.totalorder %s23, 1
        %s3024 = scalar_select %p3023, %s23, 1
        %s3025 = smul.addr %s3024, 2
        %s3026 = smul.addr %s3025, 8
        %s3027 = scalar_lea.vmem %s11, %s3026
      $region76: #{t_stconv_forward.1} parent=71 // pred_fallthru
        _
    $region72: #{t_stconv_forward.1} parent=5 // pred_fallthru
      _
  $region6: #{t_stconv_forward.1} parent=0 // loop_footer
    %s21 = sadd.s32 1, %s17
  $region7: #{t_stconv_forward.1} parent=0 // loop_footer_branch
    %16 = sbr.rel target = $region3
  $region8: #{t_stconv_forward.1} parent=0 // loop_exit
    _

</llo_original>
